<compile_context>
chip_gen: v7x
topology: tpu7x:2x2x1
jax: 0.10.0
libtpu: 0.0.40
codegen_flags: <defaults>
</compile_context>

<pallas_src>
import functools

import jax
import jax.numpy as jnp
from jax.experimental import pallas as pl
from jax.experimental.pallas import tpu as pltpu


# ----------------------------------------------------------------------------
# Fused Block18 kernel: one grid cell = (batch n, output row band hb)
# ----------------------------------------------------------------------------
def _make_block18_kernel(stride, THo, Wout, Cmid, Cout, Hout, has_downsample):
    s = stride
    nph = s * s                    # number of stride-phase input bands
    P_halo = (THo + 2) * Wout      # out1 rows incl. 1-row halo on each side
    P_out = THo * Wout

    def kernel(*refs):
        phase_refs = refs[:nph]
        w1_ref, b1_ref, w2_ref = refs[nph:nph + 3]
        if has_downsample:
            wd_ref, b2_ref, o_ref, o1_ref = refs[nph + 3:]
        else:
            b2_ref, o_ref, o1_ref = refs[nph + 3:]

        hb = pl.program_id(1)

        # ---- conv1 (+ folded bn1) + relu : taps built in-kernel, one matmul ----
        # Tap (kh,kw) at out1 row r, col j needs x[s*r+kh-1, s*j+kw-1], which is
        # phase (kh%s, kw%s) at (r+kh//s+1, j+kw//s+1) in the band coordinates.
        taps1 = []
        for kh in range(3):
            qh, ph = divmod(kh, s)
            for kw in range(3):
                qw, pw = divmod(kw, s)
                pr = phase_refs[ph * s + pw]
                taps1.append(pr[qh:qh + THo + 2, qw + 1:qw + 1 + Wout, :])
        taps1 = jnp.concatenate(taps1, axis=-1).reshape(P_halo, -1)
        acc1 = jnp.dot(taps1, w1_ref[...], preferred_element_type=jnp.float32)
        out1 = jnp.maximum(acc1 + b1_ref[...], 0.0)          # (P_halo, Cmid) f32
        out1 = out1.reshape(THo + 2, Wout, Cmid)

        # Halo rows that fall outside the image act as conv2's zero padding.
        rr = jax.lax.broadcasted_iota(jnp.int32, (THo + 2, 1, 1), 0)
        rglob = hb * THo - 1 + rr
        keep = jnp.logical_and(rglob >= 0, rglob < Hout)
        out1 = jnp.where(keep, out1, 0.0)

        # Stage out1 (with zero W padding) in VMEM; it never touches HBM.
        o1_ref[...] = jnp.zeros((THo + 2, Wout + 2, Cmid), o1_ref.dtype)
        o1_ref[:, 1:Wout + 1, :] = out1.astype(o1_ref.dtype)

        # ---- conv2 taps built in-kernel from the VMEM band ----
        taps2 = jnp.concatenate(
            [o1_ref[kh:kh + THo, kw:kw + Wout, :]
             for kh in range(3) for kw in range(3)],
            axis=-1)                                          # (THo, Wout, 9*Cmid)
        taps2 = taps2.reshape(P_out, -1)
        acc2 = jnp.dot(taps2, w2_ref[...], preferred_element_type=jnp.float32)

        # ---- residual path fused in (input sliced from the resident bands) ----
        rs = 2 if s == 1 else 1
        pidx = 0 if s == 1 else (1 * s + 1)                   # phase holding x[::s, ::s]
        xs = phase_refs[pidx][rs:rs + THo, rs:rs + Wout, :].reshape(P_out, -1)
        if has_downsample:      # 1x1 strided conv (+ folded bn) on the MXU
            acc2 = acc2 + jnp.dot(xs, wd_ref[...],
                                  preferred_element_type=jnp.float32)
        else:                   # plain identity
            acc2 = acc2 + xs.astype(jnp.float32)

        out = jnp.maximum(acc2 + b2_ref[...], 0.0)
        o_ref[...] = out.astype(o_ref.dtype)

    return kernel


# ----------------------------------------------------------------------------
# Helpers
# ----------------------------------------------------------------------------
def fold_bn(gamma, beta, mean, var, eps=1e-5):
    scale = gamma / jnp.sqrt(var + eps)
    bias = beta - mean * scale
    return (scale.reshape(1, -1).astype(jnp.float32),
            bias.reshape(1, -1).astype(jnp.float32))


def _pick_band(Hout, Wout, target):
    """Largest divisor d of Hout with d*Wout <= target (>=1)."""
    best = 1
    for d in range(1, Hout + 1):
        if Hout % d == 0 and d * Wout <= target:
            best = d
    return best


# ----------------------------------------------------------------------------
# Block18 forward
# ----------------------------------------------------------------------------
@functools.partial(jax.jit, static_argnames=("stride", "compute_dtype", "band_target"))
def block18_forward(x_nchw, params, stride, compute_dtype=jnp.float32,
                    band_target=1024):
    x = jnp.transpose(x_nchw, (0, 2, 3, 1)).astype(jnp.float32)  # NHWC
    N, H, W, Cin = x.shape
    Cmid = params["w1"].shape[-1]
    Cout = params["w2"].shape[-1]
    Hout = (H - 1) // stride + 1
    Wout = (W - 1) // stride + 1
    has_ds = (stride != 1) or (Cin != Cout)

    # Fold eval-mode BN into weights/biases (scale is per-Cout -> exact).
    s1, b1 = fold_bn(params["g1"], params["be1"], params["m1"], params["v1"])
    s2, b2 = fold_bn(params["g2"], params["be2"], params["m2"], params["v2"])
    w1f = (params["w1"].reshape(9 * Cin, Cmid) * s1).astype(compute_dtype)
    w2f = (params["w2"].reshape(9 * Cmid, Cout) * s2).astype(compute_dtype)
    if has_ds:
        sd, bd = fold_bn(params["gd"], params["bed"], params["md"], params["vd"])
        wdf = (params["wd"].reshape(Cin, Cout) * sd).astype(compute_dtype)
        b2d = b2 + bd
    else:
        wdf = None
        b2d = b2

    THo = _pick_band(Hout, Wout, band_target)   # output rows per band
    n_hb = Hout // THo

    # --- stride-phase-split, halo-padded x row bands (conv1 input, ~1x of x) ---
    # Phase (ph,pw)[t,u] = x[s*(t-1)+ph-1, s*(u-1)+pw-1], zero outside the image.
    qmax = 2 // stride
    rows_band = THo + 2 + qmax          # out1 halo rows + conv1 row reach
    cols_pha = Wout + 1 + qmax
    T_total = Hout + 2 + qmax

    top = left = 1 + stride
    bot = max(0, stride * (Hout + 2 + qmax) - (top + H))
    right = max(0, stride * (Wout + 1 + qmax) - (left + W))
    xpad2 = jnp.pad(x, ((0, 0), (top, bot), (left, right), (0, 0)))

    row_idx = jnp.arange(n_hb)[:, None] * THo + jnp.arange(rows_band)[None, :]
    phase_args = []
    for ph in range(stride):
        for pw in range(stride):
            P = xpad2[:, ph::stride, pw::stride, :][:, :T_total, :cols_pha, :]
            Pb = P[:, row_idx]          # (N, n_hb, rows_band, cols_pha, Cin)
            phase_args.append(Pb.astype(compute_dtype))

    idx_band = lambda n, hb: (n, hb, 0, 0, 0)
    idx_w = lambda n, hb: (0, 0)

    in_specs = [pl.BlockSpec((pl.Squeezed(), pl.Squeezed(), rows_band, cols_pha, Cin),
                             idx_band)
                for _ in range(stride * stride)]
    args = list(phase_args)
    in_specs += [pl.BlockSpec((9 * Cin, Cmid), idx_w),
                 pl.BlockSpec((1, Cmid), idx_w),
                 pl.BlockSpec((9 * Cmid, Cout), idx_w)]
    args += [w1f, b1, w2f]
    if has_ds:
        in_specs.append(pl.BlockSpec((Cin, Cout), idx_w))
        args.append(wdf)
    in_specs.append(pl.BlockSpec((1, Cout), idx_w))
    args.append(b2d)

    kernel = _make_block18_kernel(stride, THo, Wout, Cmid, Cout, Hout, has_ds)
    out = pl.pallas_call(
        kernel,
        out_shape=jax.ShapeDtypeStruct((N, n_hb, THo * Wout, Cout), jnp.float32),
        grid=(N, n_hb),
        in_specs=in_specs,
        out_specs=pl.BlockSpec((pl.Squeezed(), pl.Squeezed(), THo * Wout, Cout),
                               lambda n, hb: (n, hb, 0, 0)),
        scratch_shapes=[pltpu.VMEM((THo + 2, Wout + 2, Cmid), compute_dtype)],
        compiler_params=pltpu.CompilerParams(
            dimension_semantics=("parallel", "parallel"),
            vmem_limit_bytes=32 * 1024 * 1024),
    )(*args)

    out = out.reshape(N, Hout, Wout, Cout)
    # NOTE: for real ResNet stages (Cout >= 64) the (THo*Wout, Cout) slab is
    # reasonably lane-dense; at tiny test channel counts stores are masked.
    return jnp.transpose(out, (0, 3, 1, 2))             # back to NCHW


# ----------------------------------------------------------------------------
# Pure-JAX reference (lax.conv) for correctness checking
# ----------------------------------------------------------------------------
def ref_forward(x_nchw, params, stride):
    dn = ("NHWC", "HWIO", "NHWC")
    x = jnp.transpose(x_nchw, (0, 2, 3, 1)).astype(jnp.float32)
    Cin = x.shape[-1]
    Cout = params["w2"].shape[-1]

    def conv(v, w, s, pad):
        return jax.lax.conv_general_dilated(v, w, (s, s), pad, dimension_numbers=dn)

    def bn(v, scale, bias):
        return v * scale.reshape(1, 1, 1, -1) + bias.reshape(1, 1, 1, -1)

    s1, b1 = fold_bn(params["g1"], params["be1"], params["m1"], params["v1"])
    s2, b2 = fold_bn(params["g2"], params["be2"], params["m2"], params["v2"])
    out = jax.nn.relu(bn(conv(x, params["w1"], stride, [(1, 1), (1, 1)]), s1, b1))
    out = bn(conv(out, params["w2"], 1, [(1, 1), (1, 1)]), s2, b2)
    if stride != 1 or Cin != Cout:
        sd, bd = fold_bn(params["gd"], params["bed"], params["md"], params["vd"])
        identity = bn(conv(x, params["wd"], stride, [(0, 0), (0, 0)]), sd, bd)
    else:
        identity = x
    out = jax.nn.relu(out + identity)
    return jnp.transpose(out, (0, 3, 1, 2))


# ----------------------------------------------------------------------------
def make_params(key, Cin, Cout, has_ds):
    ks = jax.random.split(key, 6)

    def bn_params(k, C):
        ka, kb, kc, kd = jax.random.split(k, 4)
        return (0.5 + jax.random.uniform(ka, (C,), jnp.float32),
                0.1 * jax.random.normal(kb, (C,), jnp.float32),
                0.1 * jax.random.normal(kc, (C,), jnp.float32),
                0.5 + jax.random.uniform(kd, (C,), jnp.float32))

    p = {
        "w1": 0.1 * jax.random.normal(ks[0], (3, 3, Cin, Cout), jnp.float32),
        "w2": 0.1 * jax.random.normal(ks[1], (3, 3, Cout, Cout), jnp.float32),
    }
    p["g1"], p["be1"], p["m1"], p["v1"] = bn_params(ks[2], Cout)
    p["g2"], p["be2"], p["m2"], p["v2"] = bn_params(ks[3], Cout)
    if has_ds:
        p["wd"] = 0.1 * jax.random.normal(ks[4], (1, 1, Cin, Cout), jnp.float32)
        p["gd"], p["bed"], p["md"], p["vd"] = bn_params(ks[5], Cout)
    return p


if __name__ == "__main__":
    key = jax.random.PRNGKey(0)
    k_x, k_xb, k_p1, k_p2 = jax.random.split(key, 4)

    # Config A: downsample block (stride 2, 4 -> 8 channels), single band.
    N, Cin, Cout, H, W, stride = 2, 4, 8, 16, 16, 2
    x = jax.random.normal(k_x, (N, Cin, H, W), jnp.float32)       # NCHW
    params = make_params(k_p1, Cin, Cout, has_ds=True)

    out = jax.block_until_ready(block18_forward(x, params, stride=stride))
    ref = ref_forward(x, params, stride)
    assert out.shape == (N, Cout, 8, 8)
    assert jnp.allclose(out, ref, atol=1e-4, rtol=1e-4), "A: mismatch (f32)"

    # Config A with the bf16 MXU-native compute path (f32 accumulation).
    out_bf16 = jax.block_until_ready(
        block18_forward(x, params, stride=stride, compute_dtype=jnp.bfloat16))
    assert jnp.allclose(out_bf16, ref, atol=1e-1, rtol=1e-1), "A: mismatch (bf16)"

    # Config B: identity block (stride 1, same channels), multiple row bands
    # to exercise the in-kernel halo / band-boundary logic.
    xb = jax.random.normal(k_xb, (2, 8, 16, 16), jnp.float32)
    pb = make_params(k_p2, 8, 8, has_ds=False)
    outb = jax.block_until_ready(block18_forward(xb, pb, stride=1, band_target=64))
    refb = ref_forward(xb, pb, 1)
    assert jnp.allclose(outb, refb, atol=1e-4, rtol=1e-4), "B: mismatch"

    # Config C: downsample block with multiple row bands (stride-2 halo logic).
    outc = jax.block_until_ready(
        block18_forward(x, params, stride=stride, band_target=16))
    assert jnp.allclose(outc, ref, atol=1e-4, rtol=1e-4), "C: mismatch"

    print("KERNEL_OK")
</pallas_src>

<mosaic_0001>
module attributes {stable_mosaic.version = 11 : i64} {
  func.func @kernel(%arg0: i32, %arg1: i32, %arg2: memref<1x1x11x10x4xf32, #tpu.memory_space<vmem>>, %arg3: memref<1x1x11x10x4xf32, #tpu.memory_space<vmem>>, %arg4: memref<1x1x11x10x4xf32, #tpu.memory_space<vmem>>, %arg5: memref<1x1x11x10x4xf32, #tpu.memory_space<vmem>>, %arg6: memref<36x8xf32, #tpu.memory_space<vmem>>, %arg7: memref<1x8xf32, #tpu.memory_space<vmem>>, %arg8: memref<72x8xf32, #tpu.memory_space<vmem>>, %arg9: memref<4x8xf32, #tpu.memory_space<vmem>>, %arg10: memref<1x8xf32, #tpu.memory_space<vmem>>, %arg11: memref<1x1x64x8xf32, #tpu.memory_space<vmem>>, %arg12: memref<10x10x8xf32, #tpu.memory_space<vmem>>) attributes {dimension_semantics = [#tpu.dimension_semantics<parallel>, #tpu.dimension_semantics<parallel>], iteration_bounds = array<i64: 2, 1>, scalar_prefetch = 0 : i64, scratch_operands = 1 : i64, tpu.core_type = #tpu.core_type<tc>, window_params = [{transform_indices = @transform_0, window_bounds = array<i64: 1, 1, 11, 10, 4>}, {transform_indices = @transform_1, window_bounds = array<i64: 1, 1, 11, 10, 4>}, {transform_indices = @transform_2, window_bounds = array<i64: 1, 1, 11, 10, 4>}, {transform_indices = @transform_3, window_bounds = array<i64: 1, 1, 11, 10, 4>}, {pipeline_mode = #tpu.pipeline_mode<synchronous>, transform_indices = @transform_4, window_bounds = array<i64: 36, 8>}, {pipeline_mode = #tpu.pipeline_mode<synchronous>, transform_indices = @transform_5, window_bounds = array<i64: 1, 8>}, {pipeline_mode = #tpu.pipeline_mode<synchronous>, transform_indices = @transform_6, window_bounds = array<i64: 72, 8>}, {pipeline_mode = #tpu.pipeline_mode<synchronous>, transform_indices = @transform_7, window_bounds = array<i64: 4, 8>}, {pipeline_mode = #tpu.pipeline_mode<synchronous>, transform_indices = @transform_8, window_bounds = array<i64: 1, 8>}, {transform_indices = @transform_9, window_bounds = array<i64: 1, 1, 64, 8>}]} {
    %c0 = arith.constant 0 : index
    %c0_0 = arith.constant 0 : index
    %c0_1 = arith.constant 0 : index
    %c1 = arith.constant 1 : index
    %c0_2 = arith.constant 0 : index
    %0 = vector.load %arg2[%c0, %c0_0, %c0_1, %c1, %c0_2] : memref<1x1x11x10x4xf32, #tpu.memory_space<vmem>>, vector<1x1x10x8x4xf32>
    %1 = vector.shape_cast %0 : vector<1x1x10x8x4xf32> to vector<10x8x4xf32>
    %c0_3 = arith.constant 0 : index
    %c0_4 = arith.constant 0 : index
    %c0_5 = arith.constant 0 : index
    %c1_6 = arith.constant 1 : index
    %c0_7 = arith.constant 0 : index
    %2 = vector.load %arg3[%c0_3, %c0_4, %c0_5, %c1_6, %c0_7] : memref<1x1x11x10x4xf32, #tpu.memory_space<vmem>>, vector<1x1x10x8x4xf32>
    %3 = vector.shape_cast %2 : vector<1x1x10x8x4xf32> to vector<10x8x4xf32>
    %c0_8 = arith.constant 0 : index
    %c0_9 = arith.constant 0 : index
    %c0_10 = arith.constant 0 : index
    %c2 = arith.constant 2 : index
    %c0_11 = arith.constant 0 : index
    %4 = vector.load %arg2[%c0_8, %c0_9, %c0_10, %c2, %c0_11] : memref<1x1x11x10x4xf32, #tpu.memory_space<vmem>>, vector<1x1x10x8x4xf32>
    %5 = vector.shape_cast %4 : vector<1x1x10x8x4xf32> to vector<10x8x4xf32>
    %c0_12 = arith.constant 0 : index
    %c0_13 = arith.constant 0 : index
    %c0_14 = arith.constant 0 : index
    %c1_15 = arith.constant 1 : index
    %c0_16 = arith.constant 0 : index
    %6 = vector.load %arg4[%c0_12, %c0_13, %c0_14, %c1_15, %c0_16] : memref<1x1x11x10x4xf32, #tpu.memory_space<vmem>>, vector<1x1x10x8x4xf32>
    %7 = vector.shape_cast %6 : vector<1x1x10x8x4xf32> to vector<10x8x4xf32>
    %c0_17 = arith.constant 0 : index
    %c0_18 = arith.constant 0 : index
    %c0_19 = arith.constant 0 : index
    %c1_20 = arith.constant 1 : index
    %c0_21 = arith.constant 0 : index
    %8 = vector.load %arg5[%c0_17, %c0_18, %c0_19, %c1_20, %c0_21] : memref<1x1x11x10x4xf32, #tpu.memory_space<vmem>>, vector<1x1x10x8x4xf32>
    %9 = vector.shape_cast %8 : vector<1x1x10x8x4xf32> to vector<10x8x4xf32>
    %c0_22 = arith.constant 0 : index
    %c0_23 = arith.constant 0 : index
    %c0_24 = arith.constant 0 : index
    %c2_25 = arith.constant 2 : index
    %c0_26 = arith.constant 0 : index
    %10 = vector.load %arg4[%c0_22, %c0_23, %c0_24, %c2_25, %c0_26] : memref<1x1x11x10x4xf32, #tpu.memory_space<vmem>>, vector<1x1x10x8x4xf32>
    %11 = vector.shape_cast %10 : vector<1x1x10x8x4xf32> to vector<10x8x4xf32>
    %c0_27 = arith.constant 0 : index
    %c0_28 = arith.constant 0 : index
    %c1_29 = arith.constant 1 : index
    %c1_30 = arith.constant 1 : index
    %c0_31 = arith.constant 0 : index
    %12 = vector.load %arg2[%c0_27, %c0_28, %c1_29, %c1_30, %c0_31] : memref<1x1x11x10x4xf32, #tpu.memory_space<vmem>>, vector<1x1x10x8x4xf32>
    %13 = vector.shape_cast %12 : vector<1x1x10x8x4xf32> to vector<10x8x4xf32>
    %c0_32 = arith.constant 0 : index
    %c0_33 = arith.constant 0 : index
    %c1_34 = arith.constant 1 : index
    %c1_35 = arith.constant 1 : index
    %c0_36 = arith.constant 0 : index
    %14 = vector.load %arg3[%c0_32, %c0_33, %c1_34, %c1_35, %c0_36] : memref<1x1x11x10x4xf32, #tpu.memory_space<vmem>>, vector<1x1x10x8x4xf32>
    %15 = vector.shape_cast %14 : vector<1x1x10x8x4xf32> to vector<10x8x4xf32>
    %c0_37 = arith.constant 0 : index
    %c0_38 = arith.constant 0 : index
    %c1_39 = arith.constant 1 : index
    %c2_40 = arith.constant 2 : index
    %c0_41 = arith.constant 0 : index
    %16 = vector.load %arg2[%c0_37, %c0_38, %c1_39, %c2_40, %c0_41] : memref<1x1x11x10x4xf32, #tpu.memory_space<vmem>>, vector<1x1x10x8x4xf32>
    %17 = vector.shape_cast %16 : vector<1x1x10x8x4xf32> to vector<10x8x4xf32>
    %18 = tpu.concatenate %1, %3, %5, %7, %9, %11, %13, %15, %17 in 2 : vector<10x8x4xf32>, vector<10x8x4xf32>, vector<10x8x4xf32>, vector<10x8x4xf32>, vector<10x8x4xf32>, vector<10x8x4xf32>, vector<10x8x4xf32>, vector<10x8x4xf32>, vector<10x8x4xf32> -> vector<10x8x36xf32>
    %19 = vector.shape_cast %18 : vector<10x8x36xf32> to vector<80x36xf32>
    %c0_42 = arith.constant 0 : index
    %c0_43 = arith.constant 0 : index
    %20 = vector.load %arg6[%c0_42, %c0_43] : memref<36x8xf32, #tpu.memory_space<vmem>>, vector<36x8xf32>
    %cst = arith.constant dense<0.000000e+00> : vector<80x8xf32>
    %21 = tpu.matmul %19, %20, %cst {dimension_numbers = #tpu.dot_dimension_numbers<[1], [0], [0], [1], [0, 0, 1, 1], [], []>} : vector<80x36xf32>, vector<36x8xf32>, vector<80x8xf32> -> vector<80x8xf32>
    %c0_44 = arith.constant 0 : index
    %c0_45 = arith.constant 0 : index
    %22 = vector.load %arg7[%c0_44, %c0_45] : memref<1x8xf32, #tpu.memory_space<vmem>>, vector<1x8xf32>
    %23 = vector.broadcast %22 : vector<1x8xf32> to vector<80x8xf32>
    %24 = arith.addf %21, %23 : vector<80x8xf32>
    %cst_46 = arith.constant 0.000000e+00 : f32
    %25 = vector.broadcast %cst_46 : f32 to vector<80x8xf32>
    %26 = arith.maximumf %24, %25 : vector<80x8xf32>
    %27 = vector.shape_cast %26 : vector<80x8xf32> to vector<10x8x8xf32>
    %28 = tpu.iota {dimensions = array<i32: 0>} : vector<10x1x1xi32>
    %c8_i32 = arith.constant 8 : i32
    %29 = arith.muli %arg1, %c8_i32 : i32
    %c1_i32 = arith.constant 1 : i32
    %30 = arith.subi %29, %c1_i32 : i32
    %31 = vector.broadcast %30 : i32 to vector<10x1x1xi32>
    %32 = arith.addi %31, %28 : vector<10x1x1xi32>
    %c0_i32 = arith.constant 0 : i32
    %33 = vector.broadcast %c0_i32 : i32 to vector<10x1x1xi32>
    %34 = arith.cmpi sge, %32, %33 : vector<10x1x1xi32>
    %c8_i32_47 = arith.constant 8 : i32
    %35 = vector.broadcast %c8_i32_47 : i32 to vector<10x1x1xi32>
    %36 = arith.cmpi slt, %32, %35 : vector<10x1x1xi32>
    %37 = arith.andi %34, %36 : vector<10x1x1xi1>
    %cst_48 = arith.constant 0.000000e+00 : f32
    %38 = vector.shape_cast %37 : vector<10x1x1xi1> to vector<10x1x1xi1>
    %39 = vector.broadcast %38 : vector<10x1x1xi1> to vector<10x8x8xi1>
    %40 = vector.broadcast %cst_48 : f32 to vector<10x8x8xf32>
    %41 = arith.select %39, %27, %40 : vector<10x8x8xi1>, vector<10x8x8xf32>
    %cst_49 = arith.constant 0.000000e+00 : f32
    %42 = vector.broadcast %cst_49 : f32 to vector<10x10x8xf32>
    %c0_50 = arith.constant 0 : index
    %c0_51 = arith.constant 0 : index
    %c0_52 = arith.constant 0 : index
    %43 = vector.load %arg12[%c0_50, %c0_51, %c0_52] : memref<10x10x8xf32, #tpu.memory_space<vmem>>, vector<10x10x8xf32>
    tpu.vector_store %arg12[%c0_50, %c0_51, %c0_52], %42 {strides = array<i32>} : memref<10x10x8xf32, #tpu.memory_space<vmem>>, vector<10x10x8xf32>,
    %c0_53 = arith.constant 0 : index
    %c1_54 = arith.constant 1 : index
    %c0_55 = arith.constant 0 : index
    %44 = vector.load %arg12[%c0_53, %c1_54, %c0_55] : memref<10x10x8xf32, #tpu.memory_space<vmem>>, vector<10x8x8xf32>
    tpu.vector_store %arg12[%c0_53, %c1_54, %c0_55], %41 {strides = array<i32>} : memref<10x10x8xf32, #tpu.memory_space<vmem>>, vector<10x8x8xf32>,
    %c0_56 = arith.constant 0 : index
    %c0_57 = arith.constant 0 : index
    %c0_58 = arith.constant 0 : index
    %45 = vector.load %arg12[%c0_56, %c0_57, %c0_58] : memref<10x10x8xf32, #tpu.memory_space<vmem>>, vector<8x8x8xf32>
    %c0_59 = arith.constant 0 : index
    %c1_60 = arith.constant 1 : index
    %c0_61 = arith.constant 0 : index
    %46 = vector.load %arg12[%c0_59, %c1_60, %c0_61] : memref<10x10x8xf32, #tpu.memory_space<vmem>>, vector<8x8x8xf32>
    %c0_62 = arith.constant 0 : index
    %c2_63 = arith.constant 2 : index
    %c0_64 = arith.constant 0 : index
    %47 = vector.load %arg12[%c0_62, %c2_63, %c0_64] : memref<10x10x8xf32, #tpu.memory_space<vmem>>, vector<8x8x8xf32>
    %c1_65 = arith.constant 1 : index
    %c0_66 = arith.constant 0 : index
    %c0_67 = arith.constant 0 : index
    %48 = vector.load %arg12[%c1_65, %c0_66, %c0_67] : memref<10x10x8xf32, #tpu.memory_space<vmem>>, vector<8x8x8xf32>
    %c1_68 = arith.constant 1 : index
    %c1_69 = arith.constant 1 : index
    %c0_70 = arith.constant 0 : index
    %49 = vector.load %arg12[%c1_68, %c1_69, %c0_70] : memref<10x10x8xf32, #tpu.memory_space<vmem>>, vector<8x8x8xf32>
    %c1_71 = arith.constant 1 : index
    %c2_72 = arith.constant 2 : index
    %c0_73 = arith.constant 0 : index
    %50 = vector.load %arg12[%c1_71, %c2_72, %c0_73] : memref<10x10x8xf32, #tpu.memory_space<vmem>>, vector<8x8x8xf32>
    %c2_74 = arith.constant 2 : index
    %c0_75 = arith.constant 0 : index
    %c0_76 = arith.constant 0 : index
    %51 = vector.load %arg12[%c2_74, %c0_75, %c0_76] : memref<10x10x8xf32, #tpu.memory_space<vmem>>, vector<8x8x8xf32>
    %c2_77 = arith.constant 2 : index
    %c1_78 = arith.constant 1 : index
    %c0_79 = arith.constant 0 : index
    %52 = vector.load %arg12[%c2_77, %c1_78, %c0_79] : memref<10x10x8xf32, #tpu.memory_space<vmem>>, vector<8x8x8xf32>
    %c2_80 = arith.constant 2 : index
    %c2_81 = arith.constant 2 : index
    %c0_82 = arith.constant 0 : index
    %53 = vector.load %arg12[%c2_80, %c2_81, %c0_82] : memref<10x10x8xf32, #tpu.memory_space<vmem>>, vector<8x8x8xf32>
    %54 = tpu.concatenate %45, %46, %47, %48, %49, %50, %51, %52, %53 in 2 : vector<8x8x8xf32>, vector<8x8x8xf32>, vector<8x8x8xf32>, vector<8x8x8xf32>, vector<8x8x8xf32>, vector<8x8x8xf32>, vector<8x8x8xf32>, vector<8x8x8xf32>, vector<8x8x8xf32> -> vector<8x8x72xf32>
    %55 = vector.shape_cast %54 : vector<8x8x72xf32> to vector<64x72xf32>
    %c0_83 = arith.constant 0 : index
    %c0_84 = arith.constant 0 : index
    %56 = vector.load %arg8[%c0_83, %c0_84] : memref<72x8xf32, #tpu.memory_space<vmem>>, vector<72x8xf32>
    %cst_85 = arith.constant dense<0.000000e+00> : vector<64x8xf32>
    %57 = tpu.matmul %55, %56, %cst_85 {dimension_numbers = #tpu.dot_dimension_numbers<[1], [0], [0], [1], [0, 0, 1, 1], [], []>} : vector<64x72xf32>, vector<72x8xf32>, vector<64x8xf32> -> vector<64x8xf32>
    %c0_86 = arith.constant 0 : index
    %c0_87 = arith.constant 0 : index
    %c1_88 = arith.constant 1 : index
    %c1_89 = arith.constant 1 : index
    %c0_90 = arith.constant 0 : index
    %58 = vector.load %arg5[%c0_86, %c0_87, %c1_88, %c1_89, %c0_90] : memref<1x1x11x10x4xf32, #tpu.memory_space<vmem>>, vector<1x1x8x8x4xf32>
    %59 = vector.shape_cast %58 : vector<1x1x8x8x4xf32> to vector<8x8x4xf32>
    %60 = vector.shape_cast %59 : vector<8x8x4xf32> to vector<64x4xf32>
    %c0_91 = arith.constant 0 : index
    %c0_92 = arith.constant 0 : index
    %61 = vector.load %arg9[%c0_91, %c0_92] : memref<4x8xf32, #tpu.memory_space<vmem>>, vector<4x8xf32>
    %cst_93 = arith.constant dense<0.000000e+00> : vector<64x8xf32>
    %62 = tpu.matmul %60, %61, %cst_93 {dimension_numbers = #tpu.dot_dimension_numbers<[1], [0], [0], [1], [0, 0, 1, 1], [], []>} : vector<64x4xf32>, vector<4x8xf32>, vector<64x8xf32> -> vector<64x8xf32>
    %63 = arith.addf %57, %62 : vector<64x8xf32>
    %c0_94 = arith.constant 0 : index
    %c0_95 = arith.constant 0 : index
    %64 = vector.load %arg10[%c0_94, %c0_95] : memref<1x8xf32, #tpu.memory_space<vmem>>, vector<1x8xf32>
    %65 = vector.broadcast %64 : vector<1x8xf32> to vector<64x8xf32>
    %66 = arith.addf %63, %65 : vector<64x8xf32>
    %cst_96 = arith.constant 0.000000e+00 : f32
    %67 = vector.broadcast %cst_96 : f32 to vector<64x8xf32>
    %68 = arith.maximumf %66, %67 : vector<64x8xf32>
    %c0_97 = arith.constant 0 : index
    %c0_98 = arith.constant 0 : index
    %c0_99 = arith.constant 0 : index
    %c0_100 = arith.constant 0 : index
    %69 = vector.load %arg11[%c0_97, %c0_98, %c0_99, %c0_100] : memref<1x1x64x8xf32, #tpu.memory_space<vmem>>, vector<1x1x64x8xf32>
    %70 = vector.shape_cast %69 : vector<1x1x64x8xf32> to vector<64x8xf32>
    %71 = vector.shape_cast %68 : vector<64x8xf32> to vector<1x1x64x8xf32>
    tpu.vector_store %arg11[%c0_97, %c0_98, %c0_99, %c0_100], %71 {strides = array<i32>} : memref<1x1x64x8xf32, #tpu.memory_space<vmem>>, vector<1x1x64x8xf32>,
    return
  }
  func.func @transform_0(%arg0: i32, %arg1: i32) -> (i32, i32, i32, i32, i32) {
    %c0_i32 = arith.constant 0 : i32
    %c0_i32_0 = arith.constant 0 : i32
    %c0_i32_1 = arith.constant 0 : i32
    %c0_i32_2 = arith.constant 0 : i32
    return %arg0, %arg1, %c0_i32, %c0_i32_0, %c0_i32_1 : i32, i32, i32, i32, i32
  }
  func.func @transform_1(%arg0: i32, %arg1: i32) -> (i32, i32, i32, i32, i32) {
    %c0_i32 = arith.constant 0 : i32
    %c0_i32_0 = arith.constant 0 : i32
    %c0_i32_1 = arith.constant 0 : i32
    %c0_i32_2 = arith.constant 0 : i32
    return %arg0, %arg1, %c0_i32, %c0_i32_0, %c0_i32_1 : i32, i32, i32, i32, i32
  }
  func.func @transform_2(%arg0: i32, %arg1: i32) -> (i32, i32, i32, i32, i32) {
    %c0_i32 = arith.constant 0 : i32
    %c0_i32_0 = arith.constant 0 : i32
    %c0_i32_1 = arith.constant 0 : i32
    %c0_i32_2 = arith.constant 0 : i32
    return %arg0, %arg1, %c0_i32, %c0_i32_0, %c0_i32_1 : i32, i32, i32, i32, i32
  }
  func.func @transform_3(%arg0: i32, %arg1: i32) -> (i32, i32, i32, i32, i32) {
    %c0_i32 = arith.constant 0 : i32
    %c0_i32_0 = arith.constant 0 : i32
    %c0_i32_1 = arith.constant 0 : i32
    %c0_i32_2 = arith.constant 0 : i32
    return %arg0, %arg1, %c0_i32, %c0_i32_0, %c0_i32_1 : i32, i32, i32, i32, i32
  }
  func.func @transform_4(%arg0: i32, %arg1: i32) -> (i32, i32) {
    %c0_i32 = arith.constant 0 : i32
    %c0_i32_0 = arith.constant 0 : i32
    %c0_i32_1 = arith.constant 0 : i32
    return %c0_i32, %c0_i32_0 : i32, i32
  }
  func.func @transform_5(%arg0: i32, %arg1: i32) -> (i32, i32) {
    %c0_i32 = arith.constant 0 : i32
    %c0_i32_0 = arith.constant 0 : i32
    %c0_i32_1 = arith.constant 0 : i32
    return %c0_i32, %c0_i32_0 : i32, i32
  }
  func.func @transform_6(%arg0: i32, %arg1: i32) -> (i32, i32) {
    %c0_i32 = arith.constant 0 : i32
    %c0_i32_0 = arith.constant 0 : i32
    %c0_i32_1 = arith.constant 0 : i32
    return %c0_i32, %c0_i32_0 : i32, i32
  }
  func.func @transform_7(%arg0: i32, %arg1: i32) -> (i32, i32) {
    %c0_i32 = arith.constant 0 : i32
    %c0_i32_0 = arith.constant 0 : i32
    %c0_i32_1 = arith.constant 0 : i32
    return %c0_i32, %c0_i32_0 : i32, i32
  }
  func.func @transform_8(%arg0: i32, %arg1: i32) -> (i32, i32) {
    %c0_i32 = arith.constant 0 : i32
    %c0_i32_0 = arith.constant 0 : i32
    %c0_i32_1 = arith.constant 0 : i32
    return %c0_i32, %c0_i32_0 : i32, i32
  }
  func.func @transform_9(%arg0: i32, %arg1: i32) -> (i32, i32, i32, i32) {
    %c0_i32 = arith.constant 0 : i32
    %c0_i32_0 = arith.constant 0 : i32
    %c0_i32_1 = arith.constant 0 : i32
    return %arg0, %arg1, %c0_i32, %c0_i32_0 : i32, i32, i32, i32
  }
}

</mosaic_0001>

<llo_original>
// kernel: block18_forward.1
$region0: #{block18_forward.1}
  #allocation0 [shape = 'u32[]', space=smem, size = 0x4, offset = 0x4, fixed_abs, tag = 'smem constant byte address 0x4 - core index']
  #allocation1 [shape = 'u32[144,128]{1,0:T(1,128)}', space=vmem, size = 0x12000, scoped, tag = 'internal scratch']
  #allocation2 [shape = 'f32[10,10,8]{2,1,0:T(8,128)}', space=vmem, size = 0x14000, scoped, tag = 'scratch operand']
  %s0 = inlined_call_operand.vmem [shape: f32[2,1,11,10,4], index: 0, kind: input, shape index: {}]
  %s1 = inlined_call_operand.vmem [shape: f32[2,1,11,10,4], index: 1, kind: input, shape index: {}]
  %s2 = inlined_call_operand.vmem [shape: f32[2,1,11,10,4], index: 2, kind: input, shape index: {}]
  %s3 = inlined_call_operand.vmem [shape: f32[2,1,11,10,4], index: 3, kind: input, shape index: {}]
  %s4 = inlined_call_operand.vmem [shape: f32[36,8], index: 4, kind: input, shape index: {}]
  %s5 = inlined_call_operand.vmem [shape: f32[1,8], index: 5, kind: input, shape index: {}]
  %s6 = inlined_call_operand.vmem [shape: f32[72,8], index: 6, kind: input, shape index: {}]
  %s7 = inlined_call_operand.vmem [shape: f32[4,8], index: 7, kind: input, shape index: {}]
  %s8 = inlined_call_operand.vmem [shape: f32[1,8], index: 8, kind: input, shape index: {}]
  %s9 = inlined_call_operand.vmem [shape: f32[2,1,64,8], index: 9, kind: output, shape index: {}]
  %s10 = sld [smem:[#allocation0]]
  $region69: #{block18_forward.1} parent=0
    _
  %s12 = ssub.s32 1, %s10
  %s13 = scalar_select 0, %s12, %s10
  loop: start=0, step=1, limit=4
  $region2: #{block18_forward.1} parent=0 // loop_pre_header
    _
  $region3: #{block18_forward.1} parent=0 // loop_header
    %s15 = sphi 0, %s19
    %p16 = scmp.ge.s32.totalorder %s15, 4
    %s22 = sphi 0, %s34
    %s23 = sphi 0, %s30
    %s24 = sphi 0, %s22
    %s25 = sphi 0, %s23
    %s26 = sphi 0, %s24
    %s27 = sphi 0, %s25
    %s39 = sphi 0, %s41
    %s42 = sphi 0, %s39
    %s43 = sphi 0, %s42
    %s59 = sphi 0, %s43
    %s67 = sphi 0, %s69
    %s70 = sphi 0, %s67
    %s71 = sphi 0, %s70
    %s87 = sphi 0, %s71
    %s95 = sphi 0, %s97
    %s98 = sphi 0, %s95
    %s99 = sphi 0, %s98
    %s115 = sphi 0, %s99
    %s123 = sphi 0, %s125
    %s126 = sphi 0, %s123
    %s127 = sphi 0, %s126
    %s143 = sphi 0, %s127
    %s147 = sphi 0, %s147
    %s149 = sphi 0, %s147
    %s150 = sphi 0, %s149
    %s164 = sphi 0, %s150
    %s168 = sphi 0, %s168
    %s170 = sphi 0, %s168
    %s171 = sphi 0, %s170
    %s185 = sphi 0, %s171
    %s189 = sphi 0, %s189
    %s191 = sphi 0, %s189
    %s192 = sphi 0, %s191
    %s206 = sphi 0, %s192
    %s210 = sphi 0, %s210
    %s212 = sphi 0, %s210
    %s213 = sphi 0, %s212
    %s227 = sphi 0, %s213
    %s231 = sphi 0, %s231
    %s233 = sphi 0, %s231
    %s234 = sphi 0, %s233
    %s248 = sphi 0, %s234
    %s256 = sphi 0, %s258
    %s259 = sphi 0, %s256
    %s260 = sphi 0, %s259
    %s276 = sphi 0, %s260
  $region4: #{block18_forward.1} parent=0 // loop_header_branch
    %18 = sbr.rel (%p16) target = $region8
  $region5: #{block18_forward.1} parent=0 // loop_body
    %s20 = ssub.s32 %s15, 1
    %s21 = ssub.s32 %s15, 2
    %s28 = sadd.s32 1, %s23
    %p29 = scmp.ge.s32.totalorder %s28, 1
    %s30 = scalar_select %p29, 0, %s28
    %s31 = sadd.s32 1, %s22
    %s32 = scalar_select %p29, %s31, %s22
    %p33 = scmp.ge.s32.totalorder %s32, 2
    %s34 = scalar_select %p33, 0, %s32
    %s35 = ssub.s32 %s22, %s34
    %s36 = ssub.s32 %s23, %s30
    %s37 = sor.u32 %s35, %s36
    %p38 = scmp.eq.s32.totalorder %s37, 0
    %s40 = sadd.s32 %s39, 1
    %s41 = scalar_select %p38, %s39, %s40
    %p44 = pneg %p38
    %p45 = scmp.eq.s32.totalorder %s15, 1
    %p46 = por %p44, %p45
    %p47 = scmp.ne.s32.totalorder %s39, %s42
    %p48 = scmp.eq.s32.totalorder %s15, 0
    %p49 = por %p47, %p48
    %p50 = scmp.ne.s32.totalorder %s39, %s42
    %p51 = scmp.eq.s32.totalorder %s20, 1
    %p52 = por %p50, %p51
    %p53 = scmp.ne.s32.totalorder %s42, %s43
    %p54 = scmp.eq.s32.totalorder %s20, 0
    %p55 = por %p53, %p54
    %p56 = scmp.ne.s32.totalorder %s42, %s43
    %p57 = scmp.eq.s32.totalorder %s21, 1
    %p58 = por %p56, %p57
    %p60 = scmp.ne.s32.totalorder %s43, %s59
    %p61 = scmp.eq.s32.totalorder %s21, 0
    %p62 = por %p60, %p61
    %s63 = ssub.s32 %s22, %s34
    %s64 = ssub.s32 %s23, %s30
    %s65 = sor.u32 %s63, %s64
    %p66 = scmp.eq.s32.totalorder %s65, 0
    %s68 = sadd.s32 %s67, 1
    %s69 = scalar_select %p66, %s67, %s68
    %p72 = pneg %p66
    %p73 = scmp.eq.s32.totalorder %s15, 1
    %p74 = por %p72, %p73
    %p75 = scmp.ne.s32.totalorder %s67, %s70
    %p76 = scmp.eq.s32.totalorder %s15, 0
    %p77 = por %p75, %p76
    %p78 = scmp.ne.s32.totalorder %s67, %s70
    %p79 = scmp.eq.s32.totalorder %s20, 1
    %p80 = por %p78, %p79
    %p81 = scmp.ne.s32.totalorder %s70, %s71
    %p82 = scmp.eq.s32.totalorder %s20, 0
    %p83 = por %p81, %p82
    %p84 = scmp.ne.s32.totalorder %s70, %s71
    %p85 = scmp.eq.s32.totalorder %s21, 1
    %p86 = por %p84, %p85
    %p88 = scmp.ne.s32.totalorder %s71, %s87
    %p89 = scmp.eq.s32.totalorder %s21, 0
    %p90 = por %p88, %p89
    %s91 = ssub.s32 %s22, %s34
    %s92 = ssub.s32 %s23, %s30
    %s93 = sor.u32 %s91, %s92
    %p94 = scmp.eq.s32.totalorder %s93, 0
    %s96 = sadd.s32 %s95, 1
    %s97 = scalar_select %p94, %s95, %s96
    %p100 = pneg %p94
    %p101 = scmp.eq.s32.totalorder %s15, 1
    %p102 = por %p100, %p101
    %p103 = scmp.ne.s32.totalorder %s95, %s98
    %p104 = scmp.eq.s32.totalorder %s15, 0
    %p105 = por %p103, %p104
    %p106 = scmp.ne.s32.totalorder %s95, %s98
    %p107 = scmp.eq.s32.totalorder %s20, 1
    %p108 = por %p106, %p107
    %p109 = scmp.ne.s32.totalorder %s98, %s99
    %p110 = scmp.eq.s32.totalorder %s20, 0
    %p111 = por %p109, %p110
    %p112 = scmp.ne.s32.totalorder %s98, %s99
    %p113 = scmp.eq.s32.totalorder %s21, 1
    %p114 = por %p112, %p113
    %p116 = scmp.ne.s32.totalorder %s99, %s115
    %p117 = scmp.eq.s32.totalorder %s21, 0
    %p118 = por %p116, %p117
    %s119 = ssub.s32 %s22, %s34
    %s120 = ssub.s32 %s23, %s30
    %s121 = sor.u32 %s119, %s120
    %p122 = scmp.eq.s32.totalorder %s121, 0
    %s124 = sadd.s32 %s123, 1
    %s125 = scalar_select %p122, %s123, %s124
    %p128 = pneg %p122
    %p129 = scmp.eq.s32.totalorder %s15, 1
    %p130 = por %p128, %p129
    %p131 = scmp.ne.s32.totalorder %s123, %s126
    %p132 = scmp.eq.s32.totalorder %s15, 0
    %p133 = por %p131, %p132
    %p134 = scmp.ne.s32.totalorder %s123, %s126
    %p135 = scmp.eq.s32.totalorder %s20, 1
    %p136 = por %p134, %p135
    %p137 = scmp.ne.s32.totalorder %s126, %s127
    %p138 = scmp.eq.s32.totalorder %s20, 0
    %p139 = por %p137, %p138
    %p140 = scmp.ne.s32.totalorder %s126, %s127
    %p141 = scmp.eq.s32.totalorder %s21, 1
    %p142 = por %p140, %p141
    %p144 = scmp.ne.s32.totalorder %s127, %s143
    %p145 = scmp.eq.s32.totalorder %s21, 0
    %p146 = por %p144, %p145
    %s148 = sadd.s32 %s147, 1
    %p151 = scmp.eq.s32.totalorder %s15, 1
    %p152 = scmp.ne.s32.totalorder %s147, %s149
    %p153 = scmp.eq.s32.totalorder %s15, 0
    %p154 = por %p152, %p153
    %p155 = scmp.ne.s32.totalorder %s147, %s149
    %p156 = scmp.eq.s32.totalorder %s20, 1
    %p157 = por %p155, %p156
    %p158 = scmp.ne.s32.totalorder %s149, %s150
    %p159 = scmp.eq.s32.totalorder %s20, 0
    %p160 = por %p158, %p159
    %p161 = scmp.ne.s32.totalorder %s149, %s150
    %p162 = scmp.eq.s32.totalorder %s21, 1
    %p163 = por %p161, %p162
    %p165 = scmp.ne.s32.totalorder %s150, %s164
    %p166 = scmp.eq.s32.totalorder %s21, 0
    %p167 = por %p165, %p166
    %s169 = sadd.s32 %s168, 1
    %p172 = scmp.eq.s32.totalorder %s15, 1
    %p173 = scmp.ne.s32.totalorder %s168, %s170
    %p174 = scmp.eq.s32.totalorder %s15, 0
    %p175 = por %p173, %p174
    %p176 = scmp.ne.s32.totalorder %s168, %s170
    %p177 = scmp.eq.s32.totalorder %s20, 1
    %p178 = por %p176, %p177
    %p179 = scmp.ne.s32.totalorder %s170, %s171
    %p180 = scmp.eq.s32.totalorder %s20, 0
    %p181 = por %p179, %p180
    %p182 = scmp.ne.s32.totalorder %s170, %s171
    %p183 = scmp.eq.s32.totalorder %s21, 1
    %p184 = por %p182, %p183
    %p186 = scmp.ne.s32.totalorder %s171, %s185
    %p187 = scmp.eq.s32.totalorder %s21, 0
    %p188 = por %p186, %p187
    %s190 = sadd.s32 %s189, 1
    %p193 = scmp.eq.s32.totalorder %s15, 1
    %p194 = scmp.ne.s32.totalorder %s189, %s191
    %p195 = scmp.eq.s32.totalorder %s15, 0
    %p196 = por %p194, %p195
    %p197 = scmp.ne.s32.totalorder %s189, %s191
    %p198 = scmp.eq.s32.totalorder %s20, 1
    %p199 = por %p197, %p198
    %p200 = scmp.ne.s32.totalorder %s191, %s192
    %p201 = scmp.eq.s32.totalorder %s20, 0
    %p202 = por %p200, %p201
    %p203 = scmp.ne.s32.totalorder %s191, %s192
    %p204 = scmp.eq.s32.totalorder %s21, 1
    %p205 = por %p203, %p204
    %p207 = scmp.ne.s32.totalorder %s192, %s206
    %p208 = scmp.eq.s32.totalorder %s21, 0
    %p209 = por %p207, %p208
    %s211 = sadd.s32 %s210, 1
    %p214 = scmp.eq.s32.totalorder %s15, 1
    %p215 = scmp.ne.s32.totalorder %s210, %s212
    %p216 = scmp.eq.s32.totalorder %s15, 0
    %p217 = por %p215, %p216
    %p218 = scmp.ne.s32.totalorder %s210, %s212
    %p219 = scmp.eq.s32.totalorder %s20, 1
    %p220 = por %p218, %p219
    %p221 = scmp.ne.s32.totalorder %s212, %s213
    %p222 = scmp.eq.s32.totalorder %s20, 0
    %p223 = por %p221, %p222
    %p224 = scmp.ne.s32.totalorder %s212, %s213
    %p225 = scmp.eq.s32.totalorder %s21, 1
    %p226 = por %p224, %p225
    %p228 = scmp.ne.s32.totalorder %s213, %s227
    %p229 = scmp.eq.s32.totalorder %s21, 0
    %p230 = por %p228, %p229
    %s232 = sadd.s32 %s231, 1
    %p235 = scmp.eq.s32.totalorder %s15, 1
    %p236 = scmp.ne.s32.totalorder %s231, %s233
    %p237 = scmp.eq.s32.totalorder %s15, 0
    %p238 = por %p236, %p237
    %p239 = scmp.ne.s32.totalorder %s231, %s233
    %p240 = scmp.eq.s32.totalorder %s20, 1
    %p241 = por %p239, %p240
    %p242 = scmp.ne.s32.totalorder %s233, %s234
    %p243 = scmp.eq.s32.totalorder %s20, 0
    %p244 = por %p242, %p243
    %p245 = scmp.ne.s32.totalorder %s233, %s234
    %p246 = scmp.eq.s32.totalorder %s21, 1
    %p247 = por %p245, %p246
    %p249 = scmp.ne.s32.totalorder %s234, %s248
    %p250 = scmp.eq.s32.totalorder %s21, 0
    %p251 = por %p249, %p250
    %s252 = ssub.s32 %s22, %s34
    %s253 = ssub.s32 %s23, %s30
    %s254 = sor.u32 %s252, %s253
    %p255 = scmp.eq.s32.totalorder %s254, 0
    %s257 = sadd.s32 %s256, 1
    %s258 = scalar_select %p255, %s256, %s257
    %p261 = pneg %p255
    %p262 = scmp.eq.s32.totalorder %s15, 1
    %p263 = por %p261, %p262
    %p264 = scmp.ne.s32.totalorder %s256, %s259
    %p265 = scmp.eq.s32.totalorder %s15, 0
    %p266 = por %p264, %p265
    %p267 = scmp.ne.s32.totalorder %s256, %s259
    %p268 = scmp.eq.s32.totalorder %s20, 1
    %p269 = por %p267, %p268
    %p270 = scmp.ne.s32.totalorder %s259, %s260
    %p271 = scmp.eq.s32.totalorder %s20, 0
    %p272 = por %p270, %p271
    %p273 = scmp.ne.s32.totalorder %s259, %s260
    %p274 = scmp.eq.s32.totalorder %s21, 1
    %p275 = por %p273, %p274
    %p277 = scmp.ne.s32.totalorder %s260, %s276
    %p278 = scmp.eq.s32.totalorder %s21, 0
    %p279 = por %p277, %p278
    %p280 = scmp.le.s32.totalorder 1, %s15
    %p281 = scmp.lt.s32.totalorder %s15, 3
    %p282 = pnand %p280, %p281
    %p283 = pneg %p282
    // Predicated region
    $region9: #{block18_forward.1} parent=5 // pred_check
      _
    $region10: #{block18_forward.1} parent=5 // pred_check_branch
      %285 = sbr.rel (%p282) target = $region12
    $region11: #{block18_forward.1} parent=5 // pred_region
      %s286 = ssub.s32 %s15, 1
      // Predicated region
      $region13: #{block18_forward.1} parent=11 // pred_check
        %p287 = pneg %p160
      $region14: #{block18_forward.1} parent=11 // pred_check_branch
        %289 = sbr.rel (%p287) target = $region16
      $region15: #{block18_forward.1} parent=11 // pred_region
        _
      $region16: #{block18_forward.1} parent=11 // pred_fallthru
        _
      // Predicated region
      $region17: #{block18_forward.1} parent=11 // pred_check
        %p290 = pneg %p181
      $region18: #{block18_forward.1} parent=11 // pred_check_branch
        %292 = sbr.rel (%p290) target = $region20
      $region19: #{block18_forward.1} parent=11 // pred_region
        _
      $region20: #{block18_forward.1} parent=11 // pred_fallthru
        _
      // Predicated region
      $region21: #{block18_forward.1} parent=11 // pred_check
        %p293 = pneg %p202
      $region22: #{block18_forward.1} parent=11 // pred_check_branch
        %295 = sbr.rel (%p293) target = $region24
      $region23: #{block18_forward.1} parent=11 // pred_region
        _
      $region24: #{block18_forward.1} parent=11 // pred_fallthru
        _
      // Predicated region
      $region25: #{block18_forward.1} parent=11 // pred_check
        %p296 = pneg %p223
      $region26: #{block18_forward.1} parent=11 // pred_check_branch
        %298 = sbr.rel (%p296) target = $region28
      $region27: #{block18_forward.1} parent=11 // pred_region
        _
      $region28: #{block18_forward.1} parent=11 // pred_fallthru
        _
      // Predicated region
      $region29: #{block18_forward.1} parent=11 // pred_check
        %p299 = pneg %p244
      $region30: #{block18_forward.1} parent=11 // pred_check_branch
        %301 = sbr.rel (%p299) target = $region32
      $region31: #{block18_forward.1} parent=11 // pred_region
        _
      $region32: #{block18_forward.1} parent=11 // pred_fallthru
        _
    $region12: #{block18_forward.1} parent=5 // pred_fallthru
      _
    %p302 = scmp.lt.s32.totalorder %s15, 2
    // Predicated region
    $region33: #{block18_forward.1} parent=5 // pred_check
      %p303 = pneg %p302
    $region34: #{block18_forward.1} parent=5 // pred_check_branch
      %305 = sbr.rel (%p303) target = $region36
    $region35: #{block18_forward.1} parent=5 // pred_region
      // Predicated region
      $region37: #{block18_forward.1} parent=35 // pred_check
        %p306 = pneg %p49
      $region38: #{block18_forward.1} parent=35 // pred_check_branch
        %308 = sbr.rel (%p306) target = $region40
      $region39: #{block18_forward.1} parent=35 // pred_region
        %p309 = scmp.lt.s32.totalorder %s22, 1
        %s310 = scalar_select %p309, %s22, 1
        %p311 = scmp.lt.s32.totalorder %s23, 0
        %s312 = scalar_select %p311, %s23, 0
        %s313 = smul.addr %s312, 22
        %s314 = smul.addr %s310, 22
        %s315 = sadd.s32 %s313, %s314
        %s316 = smul.addr %s315, 8
        %s317 = scalar_lea.vmem %s0, %s316
      $region40: #{block18_forward.1} parent=35 // pred_fallthru
        _
      // Predicated region
      $region41: #{block18_forward.1} parent=35 // pred_check
        %p318 = pneg %p77
      $region42: #{block18_forward.1} parent=35 // pred_check_branch
        %320 = sbr.rel (%p318) target = $region44
      $region43: #{block18_forward.1} parent=35 // pred_region
        %p321 = scmp.lt.s32.totalorder %s22, 1
        %s322 = scalar_select %p321, %s22, 1
        %p323 = scmp.lt.s32.totalorder %s23, 0
        %s324 = scalar_select %p323, %s23, 0
        %s325 = smul.addr %s324, 22
        %s326 = smul.addr %s322, 22
        %s327 = sadd.s32 %s325, %s326
        %s328 = smul.addr %s327, 8
        %s329 = scalar_lea.vmem %s1, %s328
      $region44: #{block18_forward.1} parent=35 // pred_fallthru
        _
      // Predicated region
      $region45: #{block18_forward.1} parent=35 // pred_check
        %p330 = pneg %p105
      $region46: #{block18_forward.1} parent=35 // pred_check_branch
        %332 = sbr.rel (%p330) target = $region48
      $region47: #{block18_forward.1} parent=35 // pred_region
        %p333 = scmp.lt.s32.totalorder %s22, 1
        %s334 = scalar_select %p333, %s22, 1
        %p335 = scmp.lt.s32.totalorder %s23, 0
        %s336 = scalar_select %p335, %s23, 0
        %s337 = smul.addr %s336, 22
        %s338 = smul.addr %s334, 22
        %s339 = sadd.s32 %s337, %s338
        %s340 = smul.addr %s339, 8
        %s341 = scalar_lea.vmem %s2, %s340
      $region48: #{block18_forward.1} parent=35 // pred_fallthru
        _
      // Predicated region
      $region49: #{block18_forward.1} parent=35 // pred_check
        %p342 = pneg %p133
      $region50: #{block18_forward.1} parent=35 // pred_check_branch
        %344 = sbr.rel (%p342) target = $region52
      $region51: #{block18_forward.1} parent=35 // pred_region
        %p345 = scmp.lt.s32.totalorder %s22, 1
        %s346 = scalar_select %p345, %s22, 1
        %p347 = scmp.lt.s32.totalorder %s23, 0
        %s348 = scalar_select %p347, %s23, 0
        %s349 = smul.addr %s348, 22
        %s350 = smul.addr %s346, 22
        %s351 = sadd.s32 %s349, %s350
        %s352 = smul.addr %s351, 8
        %s353 = scalar_lea.vmem %s3, %s352
      $region52: #{block18_forward.1} parent=35 // pred_fallthru
        _
    $region36: #{block18_forward.1} parent=5 // pred_fallthru
      _
    %p354 = scmp.le.s32.totalorder 1, %s15
    %p355 = scmp.lt.s32.totalorder %s15, 3
    %p356 = pnand %p354, %p355
    %p357 = pneg %p356
    // Predicated region
    $region53: #{block18_forward.1} parent=5 // pred_check
      _
    $region54: #{block18_forward.1} parent=5 // pred_check_branch
      %359 = sbr.rel (%p356) target = $region56
    $region55: #{block18_forward.1} parent=5 // pred_region
      %s360 = ssub.s32 %s15, 1
      %p361 = scmp.lt.s32.totalorder %s24, 1
      %s362 = scalar_select %p361, %s24, 1
      %p363 = scmp.lt.s32.totalorder %s25, 0
      %s364 = scalar_select %p363, %s25, 0
      %s365 = smul.addr %s364, 22
      %s366 = smul.addr %s362, 22
      %s367 = sadd.s32 %s365, %s366
      %s368 = smul.addr %s367, 8
      %s369 = scalar_lea.vmem %s0, %s368
      %p370 = pneg %p55
      %p371 = pneg %p52
      %p372 = scmp.lt.s32.totalorder %s24, 1
      %s373 = scalar_select %p372, %s24, 1
      %p374 = scmp.lt.s32.totalorder %s25, 0
      %s375 = scalar_select %p374, %s25, 0
      %s376 = smul.addr %s375, 22
      %s377 = smul.addr %s373, 22
      %s378 = sadd.s32 %s376, %s377
      %s379 = smul.addr %s378, 8
      %s380 = scalar_lea.vmem %s1, %s379
      %p381 = pneg %p83
      %p382 = pneg %p80
      %p383 = scmp.lt.s32.totalorder %s24, 1
      %s384 = scalar_select %p383, %s24, 1
      %p385 = scmp.lt.s32.totalorder %s25, 0
      %s386 = scalar_select %p385, %s25, 0
      %s387 = smul.addr %s386, 22
      %s388 = smul.addr %s384, 22
      %s389 = sadd.s32 %s387, %s388
      %s390 = smul.addr %s389, 8
      %s391 = scalar_lea.vmem %s2, %s390
      %p392 = pneg %p111
      %p393 = pneg %p108
      %p394 = scmp.lt.s32.totalorder %s24, 1
      %s395 = scalar_select %p394, %s24, 1
      %p396 = scmp.lt.s32.totalorder %s25, 0
      %s397 = scalar_select %p396, %s25, 0
      %s398 = smul.addr %s397, 22
      %s399 = smul.addr %s395, 22
      %s400 = sadd.s32 %s398, %s399
      %s401 = smul.addr %s400, 8
      %s402 = scalar_lea.vmem %s3, %s401
      %p403 = pneg %p139
      %p404 = pneg %p136
      %p405 = pneg %p160
      %p406 = pneg %p157
      %p407 = pneg %p181
      %p408 = pneg %p178
      %p409 = pneg %p202
      %p410 = pneg %p199
      %p411 = pneg %p223
      %p412 = pneg %p220
      %p413 = pneg %p244
      %p414 = pneg %p241
      %p415 = pneg %p272
      %p416 = pneg %p269
      %p417 = scmp.lt.s32.totalorder %s24, 1
      %s418 = scalar_select %p417, %s24, 1
      %p419 = scmp.lt.s32.totalorder %s25, 0
      %s420 = scalar_select %p419, %s25, 0
      %s421 = smul.addr %s420, 8
      %s422 = smul.addr %s418, 8
      %s423 = sadd.s32 %s421, %s422
      %s424 = smul.addr %s423, 8
      %s425 = scalar_lea.vmem %s9, %s424
      %p426 = scmp.lt.s32.totalorder %s24, 1
      %s427 = scalar_select %p426, %s24, 1
      %p428 = scmp.lt.s32.totalorder %s25, 0
      %s429 = scalar_select %p428, %s25, 0
      %s430 = smul.addr %s429, 22
      %s431 = smul.addr %s427, 22
      %s432 = sadd.s32 %s430, %s431
      %s433 = smul.addr %s432, 8
      %s434 = scalar_lea.vmem %s0, %s433
      %p435 = scmp.lt.s32.totalorder %s24, 1
      %s436 = scalar_select %p435, %s24, 1
      %p437 = scmp.lt.s32.totalorder %s25, 0
      %s438 = scalar_select %p437, %s25, 0
      %s439 = smul.addr %s438, 22
      %s440 = smul.addr %s436, 22
      %s441 = sadd.s32 %s439, %s440
      %s442 = smul.addr %s441, 8
      %s443 = scalar_lea.vmem %s1, %s442
      %p444 = scmp.lt.s32.totalorder %s24, 1
      %s445 = scalar_select %p444, %s24, 1
      %p446 = scmp.lt.s32.totalorder %s25, 0
      %s447 = scalar_select %p446, %s25, 0
      %s448 = smul.addr %s447, 22
      %s449 = smul.addr %s445, 22
      %s450 = sadd.s32 %s448, %s449
      %s451 = smul.addr %s450, 8
      %s452 = scalar_lea.vmem %s2, %s451
      %p453 = scmp.lt.s32.totalorder %s24, 1
      %s454 = scalar_select %p453, %s24, 1
      %p455 = scmp.lt.s32.totalorder %s25, 0
      %s456 = scalar_select %p455, %s25, 0
      %s457 = smul.addr %s456, 22
      %s458 = smul.addr %s454, 22
      %s459 = sadd.s32 %s457, %s458
      %s460 = smul.addr %s459, 8
      %s461 = scalar_lea.vmem %s3, %s460
      %p462 = scmp.lt.s32.totalorder %s24, 1
      %s463 = scalar_select %p462, %s24, 1
      %p464 = scmp.lt.s32.totalorder %s25, 0
      %s465 = scalar_select %p464, %s25, 0
      %s466 = smul.addr %s465, 8
      %s467 = smul.addr %s463, 8
      %s468 = sadd.s32 %s466, %s467
      %s469 = smul.addr %s468, 8
      %s470 = scalar_lea.vmem %s9, %s469
      %v471 = vld [vmem:[%s434 + $0x1] sm:$0xff]
      %v472 = vld [vmem:[%s434 + $0x11] sm:$0xff]
      %v473 = vld [vmem:[%s434 + $0x21] sm:$0xff]
      %v474 = vld [vmem:[%s434 + $0x31] sm:$0xff]
      %v475 = vld [vmem:[%s434 + $0x41] sm:$0xff]
      %v476 = vld [vmem:[%s434 + $0x51] sm:$0xff]
      %v477 = vld [vmem:[%s434 + $0x61] sm:$0xff]
      %v478 = vld [vmem:[%s434 + $0x71] sm:$0xff]
      %v479 = vld [vmem:[%s434 + $0x81] sm:$0xff]
      %v480 = vld [vmem:[%s434 + $0x91] sm:$0xff]
      %v481 = vld [vmem:[%s443 + $0x1] sm:$0xff]
      %v482 = vld [vmem:[%s443 + $0x11] sm:$0xff]
      %v483 = vld [vmem:[%s443 + $0x21] sm:$0xff]
      %v484 = vld [vmem:[%s443 + $0x31] sm:$0xff]
      %v485 = vld [vmem:[%s443 + $0x41] sm:$0xff]
      %v486 = vld [vmem:[%s443 + $0x51] sm:$0xff]
      %v487 = vld [vmem:[%s443 + $0x61] sm:$0xff]
      %v488 = vld [vmem:[%s443 + $0x71] sm:$0xff]
      %v489 = vld [vmem:[%s443 + $0x81] sm:$0xff]
      %v490 = vld [vmem:[%s443 + $0x91] sm:$0xff]
      %v491 = vld [vmem:[%s434 + $0x2] sm:$0xff]
      %v492 = vld [vmem:[%s434 + $0x12] sm:$0xff]
      %v493 = vld [vmem:[%s434 + $0x22] sm:$0xff]
      %v494 = vld [vmem:[%s434 + $0x32] sm:$0xff]
      %v495 = vld [vmem:[%s434 + $0x42] sm:$0xff]
      %v496 = vld [vmem:[%s434 + $0x52] sm:$0xff]
      %v497 = vld [vmem:[%s434 + $0x62] sm:$0xff]
      %v498 = vld [vmem:[%s434 + $0x72] sm:$0xff]
      %v499 = vld [vmem:[%s434 + $0x82] sm:$0xff]
      %v500 = vld [vmem:[%s434 + $0x92] sm:$0xff]
      %v501 = vld [vmem:[%s452 + $0x1] sm:$0xff]
      %v502 = vld [vmem:[%s452 + $0x11] sm:$0xff]
      %v503 = vld [vmem:[%s452 + $0x21] sm:$0xff]
      %v504 = vld [vmem:[%s452 + $0x31] sm:$0xff]
      %v505 = vld [vmem:[%s452 + $0x41] sm:$0xff]
      %v506 = vld [vmem:[%s452 + $0x51] sm:$0xff]
      %v507 = vld [vmem:[%s452 + $0x61] sm:$0xff]
      %v508 = vld [vmem:[%s452 + $0x71] sm:$0xff]
      %v509 = vld [vmem:[%s452 + $0x81] sm:$0xff]
      %v510 = vld [vmem:[%s452 + $0x91] sm:$0xff]
      %v511 = vld [vmem:[%s461 + $0x1] sm:$0xff]
      %v512 = vld [vmem:[%s461 + $0x11] sm:$0xff]
      %v513 = vld [vmem:[%s461 + $0x21] sm:$0xff]
      %v514 = vld [vmem:[%s461 + $0x31] sm:$0xff]
      %v515 = vld [vmem:[%s461 + $0x41] sm:$0xff]
      %v516 = vld [vmem:[%s461 + $0x51] sm:$0xff]
      %v517 = vld [vmem:[%s461 + $0x61] sm:$0xff]
      %v518 = vld [vmem:[%s461 + $0x71] sm:$0xff]
      %v519 = vld [vmem:[%s461 + $0x81] sm:$0xff]
      %v520 = vld [vmem:[%s461 + $0x91] sm:$0xff]
      %v521 = vld [vmem:[%s452 + $0x2] sm:$0xff]
      %v522 = vld [vmem:[%s452 + $0x12] sm:$0xff]
      %v523 = vld [vmem:[%s452 + $0x22] sm:$0xff]
      %v524 = vld [vmem:[%s452 + $0x32] sm:$0xff]
      %v525 = vld [vmem:[%s452 + $0x42] sm:$0xff]
      %v526 = vld [vmem:[%s452 + $0x52] sm:$0xff]
      %v527 = vld [vmem:[%s452 + $0x62] sm:$0xff]
      %v528 = vld [vmem:[%s452 + $0x72] sm:$0xff]
      %v529 = vld [vmem:[%s452 + $0x82] sm:$0xff]
      %v530 = vld [vmem:[%s452 + $0x92] sm:$0xff]
      %s531 = scalar_lea.vmem %s434, 16
      %v532 = vld [vmem:[%s531 + $0x1] sm:$0xff]
      %v533 = vld [vmem:[%s531 + $0x11] sm:$0xff]
      %v534 = vld [vmem:[%s531 + $0x21] sm:$0xff]
      %v535 = vld [vmem:[%s531 + $0x31] sm:$0xff]
      %v536 = vld [vmem:[%s531 + $0x41] sm:$0xff]
      %v537 = vld [vmem:[%s531 + $0x51] sm:$0xff]
      %v538 = vld [vmem:[%s531 + $0x61] sm:$0xff]
      %v539 = vld [vmem:[%s531 + $0x71] sm:$0xff]
      %v540 = vld [vmem:[%s531 + $0x81] sm:$0xff]
      %v541 = vld [vmem:[%s531 + $0x91] sm:$0xff]
      %s542 = scalar_lea.vmem %s443, 16
      %v543 = vld [vmem:[%s542 + $0x1] sm:$0xff]
      %v544 = vld [vmem:[%s542 + $0x11] sm:$0xff]
      %v545 = vld [vmem:[%s542 + $0x21] sm:$0xff]
      %v546 = vld [vmem:[%s542 + $0x31] sm:$0xff]
      %v547 = vld [vmem:[%s542 + $0x41] sm:$0xff]
      %v548 = vld [vmem:[%s542 + $0x51] sm:$0xff]
      %v549 = vld [vmem:[%s542 + $0x61] sm:$0xff]
      %v550 = vld [vmem:[%s542 + $0x71] sm:$0xff]
      %v551 = vld [vmem:[%s542 + $0x81] sm:$0xff]
      %v552 = vld [vmem:[%s542 + $0x91] sm:$0xff]
      %v553 = vld [vmem:[%s531 + $0x2] sm:$0xff]
      %v554 = vld [vmem:[%s531 + $0x12] sm:$0xff]
      %v555 = vld [vmem:[%s531 + $0x22] sm:$0xff]
      %v556 = vld [vmem:[%s531 + $0x32] sm:$0xff]
      %v557 = vld [vmem:[%s531 + $0x42] sm:$0xff]
      %v558 = vld [vmem:[%s531 + $0x52] sm:$0xff]
      %v559 = vld [vmem:[%s531 + $0x62] sm:$0xff]
      %v560 = vld [vmem:[%s531 + $0x72] sm:$0xff]
      %v561 = vld [vmem:[%s531 + $0x82] sm:$0xff]
      %v562 = vld [vmem:[%s531 + $0x92] sm:$0xff]
      %573 = vrot.lane.b32.xlu0 %v481, 4
      %v574 = vpop.permute.xlu0 %573
      %575 = vrot.lane.b32.xlu0 %v482, 4
      %v576 = vpop.permute.xlu0 %575
      %577 = vrot.lane.b32.xlu0 %v483, 4
      %v578 = vpop.permute.xlu0 %577
      %579 = vrot.lane.b32.xlu0 %v484, 4
      %v580 = vpop.permute.xlu0 %579
      %581 = vrot.lane.b32.xlu0 %v485, 4
      %v582 = vpop.permute.xlu0 %581
      %583 = vrot.lane.b32.xlu0 %v486, 4
      %v584 = vpop.permute.xlu0 %583
      %585 = vrot.lane.b32.xlu0 %v487, 4
      %v586 = vpop.permute.xlu0 %585
      %587 = vrot.lane.b32.xlu0 %v488, 4
      %v588 = vpop.permute.xlu0 %587
      %589 = vrot.lane.b32.xlu0 %v489, 4
      %v590 = vpop.permute.xlu0 %589
      %591 = vrot.lane.b32.xlu0 %v490, 4
      %v592 = vpop.permute.xlu0 %591
      %613 = vrot.lane.b32.xlu0 %v491, 8
      %v614 = vpop.permute.xlu0 %613
      %615 = vrot.lane.b32.xlu0 %v492, 8
      %v616 = vpop.permute.xlu0 %615
      %617 = vrot.lane.b32.xlu0 %v493, 8
      %v618 = vpop.permute.xlu0 %617
      %619 = vrot.lane.b32.xlu0 %v494, 8
      %v620 = vpop.permute.xlu0 %619
      %621 = vrot.lane.b32.xlu0 %v495, 8
      %v622 = vpop.permute.xlu0 %621
      %623 = vrot.lane.b32.xlu0 %v496, 8
      %v624 = vpop.permute.xlu0 %623
      %625 = vrot.lane.b32.xlu0 %v497, 8
      %v626 = vpop.permute.xlu0 %625
      %627 = vrot.lane.b32.xlu0 %v498, 8
      %v628 = vpop.permute.xlu0 %627
      %629 = vrot.lane.b32.xlu0 %v499, 8
      %v630 = vpop.permute.xlu0 %629
      %631 = vrot.lane.b32.xlu0 %v500, 8
      %v632 = vpop.permute.xlu0 %631
      %653 = vrot.lane.b32.xlu0 %v501, 12
      %v654 = vpop.permute.xlu0 %653
      %655 = vrot.lane.b32.xlu0 %v502, 12
      %v656 = vpop.permute.xlu0 %655
      %657 = vrot.lane.b32.xlu0 %v503, 12
      %v658 = vpop.permute.xlu0 %657
      %659 = vrot.lane.b32.xlu0 %v504, 12
      %v660 = vpop.permute.xlu0 %659
      %661 = vrot.lane.b32.xlu0 %v505, 12
      %v662 = vpop.permute.xlu0 %661
      %663 = vrot.lane.b32.xlu0 %v506, 12
      %v664 = vpop.permute.xlu0 %663
      %665 = vrot.lane.b32.xlu0 %v507, 12
      %v666 = vpop.permute.xlu0 %665
      %667 = vrot.lane.b32.xlu0 %v508, 12
      %v668 = vpop.permute.xlu0 %667
      %669 = vrot.lane.b32.xlu0 %v509, 12
      %v670 = vpop.permute.xlu0 %669
      %671 = vrot.lane.b32.xlu0 %v510, 12
      %v672 = vpop.permute.xlu0 %671
      %693 = vrot.lane.b32.xlu0 %v511, 16
      %v694 = vpop.permute.xlu0 %693
      %695 = vrot.lane.b32.xlu0 %v512, 16
      %v696 = vpop.permute.xlu0 %695
      %697 = vrot.lane.b32.xlu0 %v513, 16
      %v698 = vpop.permute.xlu0 %697
      %699 = vrot.lane.b32.xlu0 %v514, 16
      %v700 = vpop.permute.xlu0 %699
      %701 = vrot.lane.b32.xlu0 %v515, 16
      %v702 = vpop.permute.xlu0 %701
      %703 = vrot.lane.b32.xlu0 %v516, 16
      %v704 = vpop.permute.xlu0 %703
      %705 = vrot.lane.b32.xlu0 %v517, 16
      %v706 = vpop.permute.xlu0 %705
      %707 = vrot.lane.b32.xlu0 %v518, 16
      %v708 = vpop.permute.xlu0 %707
      %709 = vrot.lane.b32.xlu0 %v519, 16
      %v710 = vpop.permute.xlu0 %709
      %711 = vrot.lane.b32.xlu0 %v520, 16
      %v712 = vpop.permute.xlu0 %711
      %733 = vrot.lane.b32.xlu0 %v521, 20
      %v734 = vpop.permute.xlu0 %733
      %735 = vrot.lane.b32.xlu0 %v522, 20
      %v736 = vpop.permute.xlu0 %735
      %737 = vrot.lane.b32.xlu0 %v523, 20
      %v738 = vpop.permute.xlu0 %737
      %739 = vrot.lane.b32.xlu0 %v524, 20
      %v740 = vpop.permute.xlu0 %739
      %741 = vrot.lane.b32.xlu0 %v525, 20
      %v742 = vpop.permute.xlu0 %741
      %743 = vrot.lane.b32.xlu0 %v526, 20
      %v744 = vpop.permute.xlu0 %743
      %745 = vrot.lane.b32.xlu0 %v527, 20
      %v746 = vpop.permute.xlu0 %745
      %747 = vrot.lane.b32.xlu0 %v528, 20
      %v748 = vpop.permute.xlu0 %747
      %749 = vrot.lane.b32.xlu0 %v529, 20
      %v750 = vpop.permute.xlu0 %749
      %751 = vrot.lane.b32.xlu0 %v530, 20
      %v752 = vpop.permute.xlu0 %751
      %773 = vrot.lane.b32.xlu0 %v532, 24
      %v774 = vpop.permute.xlu0 %773
      %775 = vrot.lane.b32.xlu0 %v533, 24
      %v776 = vpop.permute.xlu0 %775
      %777 = vrot.lane.b32.xlu0 %v534, 24
      %v778 = vpop.permute.xlu0 %777
      %779 = vrot.lane.b32.xlu0 %v535, 24
      %v780 = vpop.permute.xlu0 %779
      %781 = vrot.lane.b32.xlu0 %v536, 24
      %v782 = vpop.permute.xlu0 %781
      %783 = vrot.lane.b32.xlu0 %v537, 24
      %v784 = vpop.permute.xlu0 %783
      %785 = vrot.lane.b32.xlu0 %v538, 24
      %v786 = vpop.permute.xlu0 %785
      %787 = vrot.lane.b32.xlu0 %v539, 24
      %v788 = vpop.permute.xlu0 %787
      %789 = vrot.lane.b32.xlu0 %v540, 24
      %v790 = vpop.permute.xlu0 %789
      %791 = vrot.lane.b32.xlu0 %v541, 24
      %v792 = vpop.permute.xlu0 %791
      %813 = vrot.lane.b32.xlu0 %v543, 28
      %v814 = vpop.permute.xlu0 %813
      %815 = vrot.lane.b32.xlu0 %v544, 28
      %v816 = vpop.permute.xlu0 %815
      %817 = vrot.lane.b32.xlu0 %v545, 28
      %v818 = vpop.permute.xlu0 %817
      %819 = vrot.lane.b32.xlu0 %v546, 28
      %v820 = vpop.permute.xlu0 %819
      %821 = vrot.lane.b32.xlu0 %v547, 28
      %v822 = vpop.permute.xlu0 %821
      %823 = vrot.lane.b32.xlu0 %v548, 28
      %v824 = vpop.permute.xlu0 %823
      %825 = vrot.lane.b32.xlu0 %v549, 28
      %v826 = vpop.permute.xlu0 %825
      %827 = vrot.lane.b32.xlu0 %v550, 28
      %v828 = vpop.permute.xlu0 %827
      %829 = vrot.lane.b32.xlu0 %v551, 28
      %v830 = vpop.permute.xlu0 %829
      %831 = vrot.lane.b32.xlu0 %v552, 28
      %v832 = vpop.permute.xlu0 %831
      %853 = vrot.lane.b32.xlu0 %v553, 32
      %v854 = vpop.permute.xlu0 %853
      %855 = vrot.lane.b32.xlu0 %v554, 32
      %v856 = vpop.permute.xlu0 %855
      %857 = vrot.lane.b32.xlu0 %v555, 32
      %v858 = vpop.permute.xlu0 %857
      %859 = vrot.lane.b32.xlu0 %v556, 32
      %v860 = vpop.permute.xlu0 %859
      %861 = vrot.lane.b32.xlu0 %v557, 32
      %v862 = vpop.permute.xlu0 %861
      %863 = vrot.lane.b32.xlu0 %v558, 32
      %v864 = vpop.permute.xlu0 %863
      %865 = vrot.lane.b32.xlu0 %v559, 32
      %v866 = vpop.permute.xlu0 %865
      %867 = vrot.lane.b32.xlu0 %v560, 32
      %v868 = vpop.permute.xlu0 %867
      %869 = vrot.lane.b32.xlu0 %v561, 32
      %v870 = vpop.permute.xlu0 %869
      %871 = vrot.lane.b32.xlu0 %v562, 32
      %v872 = vpop.permute.xlu0 %871
      %vm883 = vcmask 31744
      %v884 = vsel %vm883, %v471, %v574
      %v885 = vsel %vm883, %v472, %v576
      %v886 = vsel %vm883, %v473, %v578
      %v887 = vsel %vm883, %v474, %v580
      %v888 = vsel %vm883, %v475, %v582
      %v889 = vsel %vm883, %v476, %v584
      %v890 = vsel %vm883, %v477, %v586
      %v891 = vsel %vm883, %v478, %v588
      %v892 = vsel %vm883, %v479, %v590
      %v893 = vsel %vm883, %v480, %v592
      %vm894 = vcmask 64512
      %v895 = vsel %vm894, %v884, %v614
      %v896 = vsel %vm894, %v885, %v616
      %v897 = vsel %vm894, %v886, %v618
      %v898 = vsel %vm894, %v887, %v620
      %v899 = vsel %vm894, %v888, %v622
      %v900 = vsel %vm894, %v889, %v624
      %v901 = vsel %vm894, %v890, %v626
      %v902 = vsel %vm894, %v891, %v628
      %v903 = vsel %vm894, %v892, %v630
      %v904 = vsel %vm894, %v893, %v632
      %vm905 = vcmask 97280
      %v906 = vsel %vm905, %v895, %v654
      %v907 = vsel %vm905, %v896, %v656
      %v908 = vsel %vm905, %v897, %v658
      %v909 = vsel %vm905, %v898, %v660
      %v910 = vsel %vm905, %v899, %v662
      %v911 = vsel %vm905, %v900, %v664
      %v912 = vsel %vm905, %v901, %v666
      %v913 = vsel %vm905, %v902, %v668
      %v914 = vsel %vm905, %v903, %v670
      %v915 = vsel %vm905, %v904, %v672
      %vm916 = vcmask 130048
      %v917 = vsel %vm916, %v906, %v694
      %v918 = vsel %vm916, %v907, %v696
      %v919 = vsel %vm916, %v908, %v698
      %v920 = vsel %vm916, %v909, %v700
      %v921 = vsel %vm916, %v910, %v702
      %v922 = vsel %vm916, %v911, %v704
      %v923 = vsel %vm916, %v912, %v706
      %v924 = vsel %vm916, %v913, %v708
      %v925 = vsel %vm916, %v914, %v710
      %v926 = vsel %vm916, %v915, %v712
      %vm927 = vcmask 162816
      %v928 = vsel %vm927, %v917, %v734
      %v929 = vsel %vm927, %v918, %v736
      %v930 = vsel %vm927, %v919, %v738
      %v931 = vsel %vm927, %v920, %v740
      %v932 = vsel %vm927, %v921, %v742
      %v933 = vsel %vm927, %v922, %v744
      %v934 = vsel %vm927, %v923, %v746
      %v935 = vsel %vm927, %v924, %v748
      %v936 = vsel %vm927, %v925, %v750
      %v937 = vsel %vm927, %v926, %v752
      %vm938 = vcmask 195584
      %v939 = vsel %vm938, %v928, %v774
      %v940 = vsel %vm938, %v929, %v776
      %v941 = vsel %vm938, %v930, %v778
      %v942 = vsel %vm938, %v931, %v780
      %v943 = vsel %vm938, %v932, %v782
      %v944 = vsel %vm938, %v933, %v784
      %v945 = vsel %vm938, %v934, %v786
      %v946 = vsel %vm938, %v935, %v788
      %v947 = vsel %vm938, %v936, %v790
      %v948 = vsel %vm938, %v937, %v792
      %vm949 = vcmask 228352
      %v950 = vsel %vm949, %v939, %v814
      %v951 = vsel %vm949, %v940, %v816
      %v952 = vsel %vm949, %v941, %v818
      %v953 = vsel %vm949, %v942, %v820
      %v954 = vsel %vm949, %v943, %v822
      %v955 = vsel %vm949, %v944, %v824
      %v956 = vsel %vm949, %v945, %v826
      %v957 = vsel %vm949, %v946, %v828
      %v958 = vsel %vm949, %v947, %v830
      %v959 = vsel %vm949, %v948, %v832
      %vm960 = vcmask 261120
      %v961 = vsel %vm960, %v950, %v854
      %v962 = vsel %vm960, %v951, %v856
      %v963 = vsel %vm960, %v952, %v858
      %v964 = vsel %vm960, %v953, %v860
      %v965 = vsel %vm960, %v954, %v862
      %v966 = vsel %vm960, %v955, %v864
      %v967 = vsel %vm960, %v956, %v866
      %v968 = vsel %vm960, %v957, %v868
      %v969 = vsel %vm960, %v958, %v870
      %v970 = vsel %vm960, %v959, %v872
      %v971 = vld [vmem:[%s4] sm:$0xff]
      %v972 = vld [vmem:[%s4 + $0x8] sm:$0xff]
      %v973 = vld [vmem:[%s4 + $0x10] sm:$0xff]
      %v974 = vld [vmem:[%s4 + $0x18] sm:$0xff]
      %v975 = vld [vmem:[%s4 + $0x20] sm:$0xf]
      %v976 = vld [vmem:[%s5] sm:$0x1]
      %v978 = vlaneseq
      %v979 = vshrl.u32 %v978, 7
      %v980 = vsub.s32 0, %v979
      %v981 = vrot.slane %v976, %v980
      %vm983 = vcmask 293888
      %v985 = vsel %vm983, %v961, 0
      %v988 = vsel %vm983, %v962, 0
      %v991 = vsel %vm983, %v963, 0
      %v994 = vsel %vm983, %v964, 0
      %v997 = vsel %vm983, %v965, 0
      %v1000 = vsel %vm983, %v966, 0
      %v1003 = vsel %vm983, %v967, 0
      %v1006 = vsel %vm983, %v968, 0
      %v1009 = vsel %vm983, %v969, 0
      %v1012 = vsel %vm983, %v970, 0
      %vm1014 = vcmask 1043456
      %v1016 = vsel %vm1014, %v975, 0
      %1018 = vmatprep.subr.mxu0 0.0
      %1019 = vmatpush1.msra.mxu0 %v971
      %1020 = vmatprep.subr.mxu0 0.0
      %1021 = vmatpush1.msra.mxu0 %v972
      %1022 = vmatprep.subr.mxu0 0.0
      %1023 = vmatpush1.msra.mxu0 %v973
      %1024 = vmatprep.subr.mxu0 0.0
      %1025 = vmatpush1.msra.mxu0 %v974
      %1026 = vmatprep.subr.mxu0 0.0
      %1027 = vmatpush1.msra.mxu0 %v1016
      %1028 = vmatprep.subr.mxu0 0.0
      %1029 = vmatpush1.msra.mxu0 0.0
      %1030 = vmatprep.subr.mxu0 0.0
      %1031 = vmatpush1.msra.mxu0 0.0
      %1032 = vmatprep.subr.mxu0 0.0
      %1033 = vmatpush1.msra.mxu0 0.0
      %1034 = vmatprep.subr.mxu0 0.0
      %1035 = vmatpush1.msra.mxu0 0.0
      %1036 = vmatprep.subr.mxu0 0.0
      %1037 = vmatpush1.msra.mxu0 0.0
      %1038 = vmatprep.subr.mxu0 0.0
      %1039 = vmatpush1.msra.mxu0 0.0
      %1040 = vmatprep.subr.mxu0 0.0
      %1041 = vmatpush1.msra.mxu0 0.0
      %1042 = vmatprep.subr.mxu0 0.0
      %1043 = vmatpush1.msra.mxu0 0.0
      %1044 = vmatprep.subr.mxu0 0.0
      %1045 = vmatpush1.msra.mxu0 0.0
      %1046 = vmatprep.subr.mxu0 0.0
      %1047 = vmatpush1.msra.mxu0 0.0
      %1048 = vmatprep.subr.mxu0 0.0
      %1049 = vmatpush1.msra.mxu0 0.0
      %1050 = vmatprep.subr.mxu0 0.0
      %1051 = vmatpush1.msra.mxu0 0.0
      %1052 = vmatprep.subr.mxu0 0.0
      %1053 = vmatpush1.msra.mxu0 0.0
      %1054 = vmatprep.subr.mxu0 0.0
      %1055 = vmatpush1.msra.mxu0 0.0
      %1056 = vmatprep.subr.mxu0 0.0
      %1057 = vmatpush1.msra.mxu0 0.0
      %1058 = vmatprep.subr.mxu0 0.0
      %1059 = vmatpush1.msra.mxu0 0.0
      %1060 = vmatprep.subr.mxu0 0.0
      %1061 = vmatpush1.msra.mxu0 0.0
      %1062 = vmatprep.subr.mxu0 0.0
      %1063 = vmatpush1.msra.mxu0 0.0
      %1064 = vmatprep.subr.mxu0 0.0
      %1065 = vmatpush1.msra.mxu0 0.0
      %1066 = vmatprep.subr.mxu0 0.0
      %1067 = vmatpush1.msra.mxu0 0.0
      %1068 = vmatprep.subr.mxu0 0.0
      %1069 = vmatpush1.msra.mxu0 0.0
      %1070 = vmatprep.subr.mxu0 0.0
      %1071 = vmatpush1.msra.mxu0 0.0
      %1072 = vmatprep.subr.mxu0 0.0
      %1073 = vmatpush1.msra.mxu0 0.0
      %1074 = vmatprep.subr.mxu0 0.0
      %1075 = vmatpush1.msra.mxu0 0.0
      %1076 = vmatprep.subr.mxu0 0.0
      %1077 = vmatpush1.msra.mxu0 0.0
      %1078 = vmatprep.subr.mxu0 0.0
      %1079 = vmatpush1.msra.mxu0 0.0
      %1080 = vmatprep.subr.mxu0 0.0
      %1081 = vmatpush1.msra.mxu0 0.0
      %1082 = vmatprep.mubr.f32.mxu0 0.0
      %1083 = vmatmul.mubr.f32.gmra.mrb[0].mxu0 %v985
      %v1084 = vpop.f32.mrb[0].mxu0
      %v1085 = vadd.f32 %v981, %v1084
      %v1086 = vpop.f32.mrb[0].mxu0
      %1087 = vmatprep.mubr.f32.mxu0 0.0
      %1088 = vmatmul.mubr.f32.gmra.mrb[0].mxu0 %v988
      %v1089 = vpop.f32.mrb[0].mxu0
      %v1090 = vadd.f32 %v981, %v1089
      %v1091 = vpop.f32.mrb[0].mxu0
      %1092 = vmatprep.mubr.f32.mxu0 0.0
      %1093 = vmatmul.mubr.f32.gmra.mrb[0].mxu0 %v991
      %v1094 = vpop.f32.mrb[0].mxu0
      %v1095 = vadd.f32 %v981, %v1094
      %v1096 = vpop.f32.mrb[0].mxu0
      %1097 = vmatprep.mubr.f32.mxu0 0.0
      %1098 = vmatmul.mubr.f32.gmra.mrb[0].mxu0 %v994
      %v1099 = vpop.f32.mrb[0].mxu0
      %v1100 = vadd.f32 %v981, %v1099
      %v1101 = vpop.f32.mrb[0].mxu0
      %1102 = vmatprep.mubr.f32.mxu0 0.0
      %1103 = vmatmul.mubr.f32.gmra.mrb[0].mxu0 %v997
      %v1104 = vpop.f32.mrb[0].mxu0
      %v1105 = vadd.f32 %v981, %v1104
      %v1106 = vpop.f32.mrb[0].mxu0
      %1107 = vmatprep.mubr.f32.mxu0 0.0
      %1108 = vmatmul.mubr.f32.gmra.mrb[0].mxu0 %v1000
      %v1109 = vpop.f32.mrb[0].mxu0
      %v1110 = vadd.f32 %v981, %v1109
      %v1111 = vpop.f32.mrb[0].mxu0
      %1112 = vmatprep.mubr.f32.mxu0 0.0
      %1113 = vmatmul.mubr.f32.gmra.mrb[0].mxu0 %v1003
      %v1114 = vpop.f32.mrb[0].mxu0
      %v1115 = vadd.f32 %v981, %v1114
      %v1116 = vpop.f32.mrb[0].mxu0
      %1117 = vmatprep.mubr.f32.mxu0 0.0
      %1118 = vmatmul.mubr.f32.gmra.mrb[0].mxu0 %v1006
      %v1119 = vpop.f32.mrb[0].mxu0
      %v1120 = vadd.f32 %v981, %v1119
      %v1121 = vpop.f32.mrb[0].mxu0
      %1122 = vmatprep.mubr.f32.mxu0 0.0
      %1123 = vmatmul.mubr.f32.gmra.mrb[0].mxu0 %v1009
      %v1124 = vpop.f32.mrb[0].mxu0
      %v1125 = vadd.f32 %v981, %v1124
      %v1126 = vpop.f32.mrb[0].mxu0
      %1127 = vmatprep.mubr.f32.mxu0 0.0
      %1128 = vmatmul.mubr.f32.gmra.mrb[0].mxu0 %v1012
      %v1129 = vpop.f32.mrb[0].mxu0
      %v1130 = vadd.f32 %v981, %v1129
      %v1131 = vpop.f32.mrb[0].mxu0
      %1132 = vdwg.mxu0
      %v1133 = vmax.f32 %v1085, 0.0
      %v1134 = vmax.f32 %v1090, 0.0
      %v1135 = vmax.f32 %v1095, 0.0
      %v1136 = vmax.f32 %v1100, 0.0
      %v1137 = vmax.f32 %v1105, 0.0
      %v1138 = vmax.f32 %v1110, 0.0
      %v1139 = vmax.f32 %v1115, 0.0
      %v1140 = vmax.f32 %v1120, 0.0
      %v1141 = vmax.f32 %v1125, 0.0
      %v1142 = vmax.f32 %v1130, 0.0
      %s1143 = smul.u32 %s25, 8
      %s1144 = ssub.s32 %s1143, 1
      %v1145 = vstv %s1144
      %v1146 = vadd.s32 %v1145, 1
      %v1147 = vadd.s32 %v1145, 2
      %v1148 = vadd.s32 %v1145, 3
      %v1149 = vadd.s32 %v1145, 4
      %v1150 = vadd.s32 %v1145, 5
      %v1151 = vadd.s32 %v1145, 6
      %v1152 = vadd.s32 %v1145, 7
      %v1153 = vadd.s32 %v1145, 8
      %v1154 = vadd.s32 %v1145, 9
      %vm1155 = vcmp.ge.s32.totalorder %v1145, 0
      %vm1156 = vcmp.ge.s32.totalorder %v1146, 0
      %vm1157 = vcmp.ge.s32.totalorder %v1147, 0
      %vm1158 = vcmp.ge.s32.totalorder %v1148, 0
      %vm1159 = vcmp.ge.s32.totalorder %v1149, 0
      %vm1160 = vcmp.ge.s32.totalorder %v1150, 0
      %vm1161 = vcmp.ge.s32.totalorder %v1151, 0
      %vm1162 = vcmp.ge.s32.totalorder %v1152, 0
      %vm1163 = vcmp.ge.s32.totalorder %v1153, 0
      %vm1164 = vcmp.ge.s32.totalorder %v1154, 0
      %vm1165 = vcmp.lt.s32.totalorder %v1145, 8
      %vm1166 = vcmp.lt.s32.totalorder %v1146, 8
      %vm1167 = vcmp.lt.s32.totalorder %v1147, 8
      %vm1168 = vcmp.lt.s32.totalorder %v1148, 8
      %vm1169 = vcmp.lt.s32.totalorder %v1149, 8
      %vm1170 = vcmp.lt.s32.totalorder %v1150, 8
      %vm1171 = vcmp.lt.s32.totalorder %v1151, 8
      %vm1172 = vcmp.lt.s32.totalorder %v1152, 8
      %vm1173 = vcmp.lt.s32.totalorder %v1153, 8
      %vm1174 = vcmp.lt.s32.totalorder %v1154, 8
      %vm1175 = vmand %vm1155, %vm1165
      %vm1176 = vmand %vm1156, %vm1166
      %vm1177 = vmand %vm1157, %vm1167
      %vm1178 = vmand %vm1158, %vm1168
      %vm1179 = vmand %vm1159, %vm1169
      %vm1180 = vmand %vm1160, %vm1170
      %vm1181 = vmand %vm1161, %vm1171
      %vm1182 = vmand %vm1162, %vm1172
      %vm1183 = vmand %vm1163, %vm1173
      %vm1184 = vmand %vm1164, %vm1174
      %v1185 = vsel %vm1175, 1, 0
      %v1186 = vsel %vm1176, 1, 0
      %v1187 = vsel %vm1177, 1, 0
      %v1188 = vsel %vm1178, 1, 0
      %v1189 = vsel %vm1179, 1, 0
      %v1190 = vsel %vm1180, 1, 0
      %v1191 = vsel %vm1181, 1, 0
      %v1192 = vsel %vm1182, 1, 0
      %v1193 = vsel %vm1183, 1, 0
      %v1194 = vsel %vm1184, 1, 0
      %vm1195 = vcmp.eq.s32.totalorder %v1185, 1
      %vm1196 = vcmp.eq.s32.totalorder %v1186, 1
      %vm1197 = vcmp.eq.s32.totalorder %v1187, 1
      %vm1198 = vcmp.eq.s32.totalorder %v1188, 1
      %vm1199 = vcmp.eq.s32.totalorder %v1189, 1
      %vm1200 = vcmp.eq.s32.totalorder %v1190, 1
      %vm1201 = vcmp.eq.s32.totalorder %v1191, 1
      %vm1202 = vcmp.eq.s32.totalorder %v1192, 1
      %vm1203 = vcmp.eq.s32.totalorder %v1193, 1
      %vm1204 = vcmp.eq.s32.totalorder %v1194, 1
      %v1205 = vsel %vm1195, %v1133, 0.0
      %v1206 = vsel %vm1196, %v1134, 0.0
      %v1207 = vsel %vm1197, %v1135, 0.0
      %v1208 = vsel %vm1198, %v1136, 0.0
      %v1209 = vsel %vm1199, %v1137, 0.0
      %v1210 = vsel %vm1200, %v1138, 0.0
      %v1211 = vsel %vm1201, %v1139, 0.0
      %v1212 = vsel %vm1202, %v1140, 0.0
      %v1213 = vsel %vm1203, %v1141, 0.0
      %v1214 = vsel %vm1204, %v1142, 0.0
      %1215 = vst.msk [vmem:[#allocation2] sm:$0xff] %vm894, 0.0
      %vm1216 = vcmask 58368
      %1217 = vst.msk [vmem:[#allocation2 + $0x8] sm:$0x3] %vm1216, 0.0
      %1218 = vst.msk [vmem:[#allocation2 + $0x10] sm:$0xff] %vm894, 0.0
      %1219 = vst.msk [vmem:[#allocation2 + $0x18] sm:$0x3] %vm1216, 0.0
      %1220 = vst.msk [vmem:[#allocation2 + $0x20] sm:$0xff] %vm894, 0.0
      %1221 = vst.msk [vmem:[#allocation2 + $0x28] sm:$0x3] %vm1216, 0.0
      %1222 = vst.msk [vmem:[#allocation2 + $0x30] sm:$0xff] %vm894, 0.0
      %1223 = vst.msk [vmem:[#allocation2 + $0x38] sm:$0x3] %vm1216, 0.0
      %1224 = vst.msk [vmem:[#allocation2 + $0x40] sm:$0xff] %vm894, 0.0
      %1225 = vst.msk [vmem:[#allocation2 + $0x48] sm:$0x3] %vm1216, 0.0
      %1226 = vst.msk [vmem:[#allocation2 + $0x50] sm:$0xff] %vm894, 0.0
      %1227 = vst.msk [vmem:[#allocation2 + $0x58] sm:$0x3] %vm1216, 0.0
      %1228 = vst.msk [vmem:[#allocation2 + $0x60] sm:$0xff] %vm894, 0.0
      %1229 = vst.msk [vmem:[#allocation2 + $0x68] sm:$0x3] %vm1216, 0.0
      %1230 = vst.msk [vmem:[#allocation2 + $0x70] sm:$0xff] %vm894, 0.0
      %1231 = vst.msk [vmem:[#allocation2 + $0x78] sm:$0x3] %vm1216, 0.0
      %1232 = vst.msk [vmem:[#allocation2 + $0x80] sm:$0xff] %vm894, 0.0
      %1233 = vst.msk [vmem:[#allocation2 + $0x88] sm:$0x3] %vm1216, 0.0
      %1234 = vst.msk [vmem:[#allocation2 + $0x90] sm:$0xff] %vm894, 0.0
      %1235 = vst.msk [vmem:[#allocation2 + $0x98] sm:$0x3] %vm1216, 0.0
      %1236 = vst.msk [vmem:[#allocation2 + $0x1] sm:$0xff] %vm894, %v1205
      %1237 = vst.msk [vmem:[#allocation2 + $0x11] sm:$0xff] %vm894, %v1206
      %1238 = vst.msk [vmem:[#allocation2 + $0x21] sm:$0xff] %vm894, %v1207
      %1239 = vst.msk [vmem:[#allocation2 + $0x31] sm:$0xff] %vm894, %v1208
      %1240 = vst.msk [vmem:[#allocation2 + $0x41] sm:$0xff] %vm894, %v1209
      %1241 = vst.msk [vmem:[#allocation2 + $0x51] sm:$0xff] %vm894, %v1210
      %1242 = vst.msk [vmem:[#allocation2 + $0x61] sm:$0xff] %vm894, %v1211
      %1243 = vst.msk [vmem:[#allocation2 + $0x71] sm:$0xff] %vm894, %v1212
      %1244 = vst.msk [vmem:[#allocation2 + $0x81] sm:$0xff] %vm894, %v1213
      %1245 = vst.msk [vmem:[#allocation2 + $0x91] sm:$0xff] %vm894, %v1214
      %v1246 = vld [vmem:[#allocation2] sm:$0xff]
      %v1247 = vld [vmem:[#allocation2 + $0x10] sm:$0xff]
      %v1248 = vld [vmem:[#allocation2 + $0x20] sm:$0xff]
      %v1249 = vld [vmem:[#allocation2 + $0x30] sm:$0xff]
      %v1250 = vld [vmem:[#allocation2 + $0x40] sm:$0xff]
      %v1251 = vld [vmem:[#allocation2 + $0x50] sm:$0xff]
      %v1252 = vld [vmem:[#allocation2 + $0x60] sm:$0xff]
      %v1253 = vld [vmem:[#allocation2 + $0x70] sm:$0xff]
      %v1254 = vld [vmem:[#allocation2 + $0x1] sm:$0xff]
      %v1255 = vld [vmem:[#allocation2 + $0x11] sm:$0xff]
      %v1256 = vld [vmem:[#allocation2 + $0x21] sm:$0xff]
      %v1257 = vld [vmem:[#allocation2 + $0x31] sm:$0xff]
      %v1258 = vld [vmem:[#allocation2 + $0x41] sm:$0xff]
      %v1259 = vld [vmem:[#allocation2 + $0x51] sm:$0xff]
      %v1260 = vld [vmem:[#allocation2 + $0x61] sm:$0xff]
      %v1261 = vld [vmem:[#allocation2 + $0x71] sm:$0xff]
      %v1262 = vld [vmem:[#allocation2 + $0x2] sm:$0xff]
      %v1263 = vld [vmem:[#allocation2 + $0x12] sm:$0xff]
      %v1264 = vld [vmem:[#allocation2 + $0x22] sm:$0xff]
      %v1265 = vld [vmem:[#allocation2 + $0x32] sm:$0xff]
      %v1266 = vld [vmem:[#allocation2 + $0x42] sm:$0xff]
      %v1267 = vld [vmem:[#allocation2 + $0x52] sm:$0xff]
      %v1268 = vld [vmem:[#allocation2 + $0x62] sm:$0xff]
      %v1269 = vld [vmem:[#allocation2 + $0x72] sm:$0xff]
      %s1270 = scalar_lea.vmem [#allocation2], 16
      %v1271 = vld [vmem:[%s1270] sm:$0xff]
      %v1272 = vld [vmem:[%s1270 + $0x10] sm:$0xff]
      %v1273 = vld [vmem:[%s1270 + $0x20] sm:$0xff]
      %v1274 = vld [vmem:[%s1270 + $0x30] sm:$0xff]
      %v1275 = vld [vmem:[%s1270 + $0x40] sm:$0xff]
      %v1276 = vld [vmem:[%s1270 + $0x50] sm:$0xff]
      %v1277 = vld [vmem:[%s1270 + $0x60] sm:$0xff]
      %v1278 = vld [vmem:[%s1270 + $0x70] sm:$0xff]
      %v1279 = vld [vmem:[%s1270 + $0x1] sm:$0xff]
      %v1280 = vld [vmem:[%s1270 + $0x11] sm:$0xff]
      %v1281 = vld [vmem:[%s1270 + $0x21] sm:$0xff]
      %v1282 = vld [vmem:[%s1270 + $0x31] sm:$0xff]
      %v1283 = vld [vmem:[%s1270 + $0x41] sm:$0xff]
      %v1284 = vld [vmem:[%s1270 + $0x51] sm:$0xff]
      %v1285 = vld [vmem:[%s1270 + $0x61] sm:$0xff]
      %v1286 = vld [vmem:[%s1270 + $0x71] sm:$0xff]
      %v1287 = vld [vmem:[%s1270 + $0x2] sm:$0xff]
      %v1288 = vld [vmem:[%s1270 + $0x12] sm:$0xff]
      %v1289 = vld [vmem:[%s1270 + $0x22] sm:$0xff]
      %v1290 = vld [vmem:[%s1270 + $0x32] sm:$0xff]
      %v1291 = vld [vmem:[%s1270 + $0x42] sm:$0xff]
      %v1292 = vld [vmem:[%s1270 + $0x52] sm:$0xff]
      %v1293 = vld [vmem:[%s1270 + $0x62] sm:$0xff]
      %v1294 = vld [vmem:[%s1270 + $0x72] sm:$0xff]
      %s1295 = scalar_lea.vmem [#allocation2], 32
      %v1296 = vld [vmem:[%s1295] sm:$0xff]
      %v1297 = vld [vmem:[%s1295 + $0x10] sm:$0xff]
      %v1298 = vld [vmem:[%s1295 + $0x20] sm:$0xff]
      %v1299 = vld [vmem:[%s1295 + $0x30] sm:$0xff]
      %v1300 = vld [vmem:[%s1295 + $0x40] sm:$0xff]
      %v1301 = vld [vmem:[%s1295 + $0x50] sm:$0xff]
      %v1302 = vld [vmem:[%s1295 + $0x60] sm:$0xff]
      %v1303 = vld [vmem:[%s1295 + $0x70] sm:$0xff]
      %v1304 = vld [vmem:[%s1295 + $0x1] sm:$0xff]
      %v1305 = vld [vmem:[%s1295 + $0x11] sm:$0xff]
      %v1306 = vld [vmem:[%s1295 + $0x21] sm:$0xff]
      %v1307 = vld [vmem:[%s1295 + $0x31] sm:$0xff]
      %v1308 = vld [vmem:[%s1295 + $0x41] sm:$0xff]
      %v1309 = vld [vmem:[%s1295 + $0x51] sm:$0xff]
      %v1310 = vld [vmem:[%s1295 + $0x61] sm:$0xff]
      %v1311 = vld [vmem:[%s1295 + $0x71] sm:$0xff]
      %v1312 = vld [vmem:[%s1295 + $0x2] sm:$0xff]
      %v1313 = vld [vmem:[%s1295 + $0x12] sm:$0xff]
      %v1314 = vld [vmem:[%s1295 + $0x22] sm:$0xff]
      %v1315 = vld [vmem:[%s1295 + $0x32] sm:$0xff]
      %v1316 = vld [vmem:[%s1295 + $0x42] sm:$0xff]
      %v1317 = vld [vmem:[%s1295 + $0x52] sm:$0xff]
      %v1318 = vld [vmem:[%s1295 + $0x62] sm:$0xff]
      %v1319 = vld [vmem:[%s1295 + $0x72] sm:$0xff]
      %1328 = vrot.lane.b32.xlu0 %v1254, 8
      %v1329 = vpop.permute.xlu0 %1328
      %1330 = vrot.lane.b32.xlu0 %v1255, 8
      %v1331 = vpop.permute.xlu0 %1330
      %1332 = vrot.lane.b32.xlu0 %v1256, 8
      %v1333 = vpop.permute.xlu0 %1332
      %1334 = vrot.lane.b32.xlu0 %v1257, 8
      %v1335 = vpop.permute.xlu0 %1334
      %1336 = vrot.lane.b32.xlu0 %v1258, 8
      %v1337 = vpop.permute.xlu0 %1336
      %1338 = vrot.lane.b32.xlu0 %v1259, 8
      %v1339 = vpop.permute.xlu0 %1338
      %1340 = vrot.lane.b32.xlu0 %v1260, 8
      %v1341 = vpop.permute.xlu0 %1340
      %1342 = vrot.lane.b32.xlu0 %v1261, 8
      %v1343 = vpop.permute.xlu0 %1342
      %1360 = vrot.lane.b32.xlu0 %v1262, 16
      %v1361 = vpop.permute.xlu0 %1360
      %1362 = vrot.lane.b32.xlu0 %v1263, 16
      %v1363 = vpop.permute.xlu0 %1362
      %1364 = vrot.lane.b32.xlu0 %v1264, 16
      %v1365 = vpop.permute.xlu0 %1364
      %1366 = vrot.lane.b32.xlu0 %v1265, 16
      %v1367 = vpop.permute.xlu0 %1366
      %1368 = vrot.lane.b32.xlu0 %v1266, 16
      %v1369 = vpop.permute.xlu0 %1368
      %1370 = vrot.lane.b32.xlu0 %v1267, 16
      %v1371 = vpop.permute.xlu0 %1370
      %1372 = vrot.lane.b32.xlu0 %v1268, 16
      %v1373 = vpop.permute.xlu0 %1372
      %1374 = vrot.lane.b32.xlu0 %v1269, 16
      %v1375 = vpop.permute.xlu0 %1374
      %1392 = vrot.lane.b32.xlu0 %v1271, 24
      %v1393 = vpop.permute.xlu0 %1392
      %1394 = vrot.lane.b32.xlu0 %v1272, 24
      %v1395 = vpop.permute.xlu0 %1394
      %1396 = vrot.lane.b32.xlu0 %v1273, 24
      %v1397 = vpop.permute.xlu0 %1396
      %1398 = vrot.lane.b32.xlu0 %v1274, 24
      %v1399 = vpop.permute.xlu0 %1398
      %1400 = vrot.lane.b32.xlu0 %v1275, 24
      %v1401 = vpop.permute.xlu0 %1400
      %1402 = vrot.lane.b32.xlu0 %v1276, 24
      %v1403 = vpop.permute.xlu0 %1402
      %1404 = vrot.lane.b32.xlu0 %v1277, 24
      %v1405 = vpop.permute.xlu0 %1404
      %1406 = vrot.lane.b32.xlu0 %v1278, 24
      %v1407 = vpop.permute.xlu0 %1406
      %1424 = vrot.lane.b32.xlu0 %v1279, 32
      %v1425 = vpop.permute.xlu0 %1424
      %1426 = vrot.lane.b32.xlu0 %v1280, 32
      %v1427 = vpop.permute.xlu0 %1426
      %1428 = vrot.lane.b32.xlu0 %v1281, 32
      %v1429 = vpop.permute.xlu0 %1428
      %1430 = vrot.lane.b32.xlu0 %v1282, 32
      %v1431 = vpop.permute.xlu0 %1430
      %1432 = vrot.lane.b32.xlu0 %v1283, 32
      %v1433 = vpop.permute.xlu0 %1432
      %1434 = vrot.lane.b32.xlu0 %v1284, 32
      %v1435 = vpop.permute.xlu0 %1434
      %1436 = vrot.lane.b32.xlu0 %v1285, 32
      %v1437 = vpop.permute.xlu0 %1436
      %1438 = vrot.lane.b32.xlu0 %v1286, 32
      %v1439 = vpop.permute.xlu0 %1438
      %1456 = vrot.lane.b32.xlu0 %v1287, 40
      %v1457 = vpop.permute.xlu0 %1456
      %1458 = vrot.lane.b32.xlu0 %v1288, 40
      %v1459 = vpop.permute.xlu0 %1458
      %1460 = vrot.lane.b32.xlu0 %v1289, 40
      %v1461 = vpop.permute.xlu0 %1460
      %1462 = vrot.lane.b32.xlu0 %v1290, 40
      %v1463 = vpop.permute.xlu0 %1462
      %1464 = vrot.lane.b32.xlu0 %v1291, 40
      %v1465 = vpop.permute.xlu0 %1464
      %1466 = vrot.lane.b32.xlu0 %v1292, 40
      %v1467 = vpop.permute.xlu0 %1466
      %1468 = vrot.lane.b32.xlu0 %v1293, 40
      %v1469 = vpop.permute.xlu0 %1468
      %1470 = vrot.lane.b32.xlu0 %v1294, 40
      %v1471 = vpop.permute.xlu0 %1470
      %1488 = vrot.lane.b32.xlu0 %v1296, 48
      %v1489 = vpop.permute.xlu0 %1488
      %1490 = vrot.lane.b32.xlu0 %v1297, 48
      %v1491 = vpop.permute.xlu0 %1490
      %1492 = vrot.lane.b32.xlu0 %v1298, 48
      %v1493 = vpop.permute.xlu0 %1492
      %1494 = vrot.lane.b32.xlu0 %v1299, 48
      %v1495 = vpop.permute.xlu0 %1494
      %1496 = vrot.lane.b32.xlu0 %v1300, 48
      %v1497 = vpop.permute.xlu0 %1496
      %1498 = vrot.lane.b32.xlu0 %v1301, 48
      %v1499 = vpop.permute.xlu0 %1498
      %1500 = vrot.lane.b32.xlu0 %v1302, 48
      %v1501 = vpop.permute.xlu0 %1500
      %1502 = vrot.lane.b32.xlu0 %v1303, 48
      %v1503 = vpop.permute.xlu0 %1502
      %1520 = vrot.lane.b32.xlu0 %v1304, 56
      %v1521 = vpop.permute.xlu0 %1520
      %1522 = vrot.lane.b32.xlu0 %v1305, 56
      %v1523 = vpop.permute.xlu0 %1522
      %1524 = vrot.lane.b32.xlu0 %v1306, 56
      %v1525 = vpop.permute.xlu0 %1524
      %1526 = vrot.lane.b32.xlu0 %v1307, 56
      %v1527 = vpop.permute.xlu0 %1526
      %1528 = vrot.lane.b32.xlu0 %v1308, 56
      %v1529 = vpop.permute.xlu0 %1528
      %1530 = vrot.lane.b32.xlu0 %v1309, 56
      %v1531 = vpop.permute.xlu0 %1530
      %1532 = vrot.lane.b32.xlu0 %v1310, 56
      %v1533 = vpop.permute.xlu0 %1532
      %1534 = vrot.lane.b32.xlu0 %v1311, 56
      %v1535 = vpop.permute.xlu0 %1534
      %1552 = vrot.lane.b32.xlu0 %v1312, 64
      %v1553 = vpop.permute.xlu0 %1552
      %1554 = vrot.lane.b32.xlu0 %v1313, 64
      %v1555 = vpop.permute.xlu0 %1554
      %1556 = vrot.lane.b32.xlu0 %v1314, 64
      %v1557 = vpop.permute.xlu0 %1556
      %1558 = vrot.lane.b32.xlu0 %v1315, 64
      %v1559 = vpop.permute.xlu0 %1558
      %1560 = vrot.lane.b32.xlu0 %v1316, 64
      %v1561 = vpop.permute.xlu0 %1560
      %1562 = vrot.lane.b32.xlu0 %v1317, 64
      %v1563 = vpop.permute.xlu0 %1562
      %1564 = vrot.lane.b32.xlu0 %v1318, 64
      %v1565 = vpop.permute.xlu0 %1564
      %1566 = vrot.lane.b32.xlu0 %v1319, 64
      %v1567 = vpop.permute.xlu0 %1566
      %v1576 = vsel %vm894, %v1246, %v1329
      %v1577 = vsel %vm894, %v1247, %v1331
      %v1578 = vsel %vm894, %v1248, %v1333
      %v1579 = vsel %vm894, %v1249, %v1335
      %v1580 = vsel %vm894, %v1250, %v1337
      %v1581 = vsel %vm894, %v1251, %v1339
      %v1582 = vsel %vm894, %v1252, %v1341
      %v1583 = vsel %vm894, %v1253, %v1343
      %v1584 = vsel %vm916, %v1576, %v1361
      %v1585 = vsel %vm916, %v1577, %v1363
      %v1586 = vsel %vm916, %v1578, %v1365
      %v1587 = vsel %vm916, %v1579, %v1367
      %v1588 = vsel %vm916, %v1580, %v1369
      %v1589 = vsel %vm916, %v1581, %v1371
      %v1590 = vsel %vm916, %v1582, %v1373
      %v1591 = vsel %vm916, %v1583, %v1375
      %v1592 = vsel %vm938, %v1584, %v1393
      %v1593 = vsel %vm938, %v1585, %v1395
      %v1594 = vsel %vm938, %v1586, %v1397
      %v1595 = vsel %vm938, %v1587, %v1399
      %v1596 = vsel %vm938, %v1588, %v1401
      %v1597 = vsel %vm938, %v1589, %v1403
      %v1598 = vsel %vm938, %v1590, %v1405
      %v1599 = vsel %vm938, %v1591, %v1407
      %v1600 = vsel %vm960, %v1592, %v1425
      %v1601 = vsel %vm960, %v1593, %v1427
      %v1602 = vsel %vm960, %v1594, %v1429
      %v1603 = vsel %vm960, %v1595, %v1431
      %v1604 = vsel %vm960, %v1596, %v1433
      %v1605 = vsel %vm960, %v1597, %v1435
      %v1606 = vsel %vm960, %v1598, %v1437
      %v1607 = vsel %vm960, %v1599, %v1439
      %vm1608 = vcmask 326656
      %v1609 = vsel %vm1608, %v1600, %v1457
      %v1610 = vsel %vm1608, %v1601, %v1459
      %v1611 = vsel %vm1608, %v1602, %v1461
      %v1612 = vsel %vm1608, %v1603, %v1463
      %v1613 = vsel %vm1608, %v1604, %v1465
      %v1614 = vsel %vm1608, %v1605, %v1467
      %v1615 = vsel %vm1608, %v1606, %v1469
      %v1616 = vsel %vm1608, %v1607, %v1471
      %vm1617 = vcmask 392192
      %v1618 = vsel %vm1617, %v1609, %v1489
      %v1619 = vsel %vm1617, %v1610, %v1491
      %v1620 = vsel %vm1617, %v1611, %v1493
      %v1621 = vsel %vm1617, %v1612, %v1495
      %v1622 = vsel %vm1617, %v1613, %v1497
      %v1623 = vsel %vm1617, %v1614, %v1499
      %v1624 = vsel %vm1617, %v1615, %v1501
      %v1625 = vsel %vm1617, %v1616, %v1503
      %vm1626 = vcmask 457728
      %v1627 = vsel %vm1626, %v1618, %v1521
      %v1628 = vsel %vm1626, %v1619, %v1523
      %v1629 = vsel %vm1626, %v1620, %v1525
      %v1630 = vsel %vm1626, %v1621, %v1527
      %v1631 = vsel %vm1626, %v1622, %v1529
      %v1632 = vsel %vm1626, %v1623, %v1531
      %v1633 = vsel %vm1626, %v1624, %v1533
      %v1634 = vsel %vm1626, %v1625, %v1535
      %vm1635 = vcmask 523264
      %v1636 = vsel %vm1635, %v1627, %v1553
      %v1637 = vsel %vm1635, %v1628, %v1555
      %v1638 = vsel %vm1635, %v1629, %v1557
      %v1639 = vsel %vm1635, %v1630, %v1559
      %v1640 = vsel %vm1635, %v1631, %v1561
      %v1641 = vsel %vm1635, %v1632, %v1563
      %v1642 = vsel %vm1635, %v1633, %v1565
      %v1643 = vsel %vm1635, %v1634, %v1567
      %v1644 = vld [vmem:[%s6] sm:$0xff]
      %v1645 = vld [vmem:[%s6 + $0x8] sm:$0xff]
      %v1646 = vld [vmem:[%s6 + $0x10] sm:$0xff]
      %v1647 = vld [vmem:[%s6 + $0x18] sm:$0xff]
      %v1648 = vld [vmem:[%s6 + $0x20] sm:$0xff]
      %v1649 = vld [vmem:[%s6 + $0x28] sm:$0xff]
      %v1650 = vld [vmem:[%s6 + $0x30] sm:$0xff]
      %v1651 = vld [vmem:[%s6 + $0x38] sm:$0xff]
      %v1652 = vld [vmem:[%s6 + $0x40] sm:$0xff]
      %s1653 = scalar_lea.vmem %s461, 16
      %v1654 = vld [vmem:[%s1653 + $0x1] sm:$0xff]
      %v1655 = vld [vmem:[%s1653 + $0x11] sm:$0xff]
      %v1656 = vld [vmem:[%s1653 + $0x21] sm:$0xff]
      %v1657 = vld [vmem:[%s1653 + $0x31] sm:$0xff]
      %v1658 = vld [vmem:[%s1653 + $0x41] sm:$0xff]
      %v1659 = vld [vmem:[%s1653 + $0x51] sm:$0xff]
      %v1660 = vld [vmem:[%s1653 + $0x61] sm:$0xff]
      %v1661 = vld [vmem:[%s1653 + $0x71] sm:$0xff]
      %v1662 = vld [vmem:[%s7] sm:$0xf]
      %v1664 = vsel %vm883, %v1654, 0
      %v1667 = vsel %vm883, %v1655, 0
      %v1670 = vsel %vm883, %v1656, 0
      %v1673 = vsel %vm883, %v1657, 0
      %v1676 = vsel %vm883, %v1658, 0
      %v1679 = vsel %vm883, %v1659, 0
      %v1682 = vsel %vm883, %v1660, 0
      %v1685 = vsel %vm883, %v1661, 0
      %v1688 = vsel %vm1014, %v1662, 0
      %1690 = vmatprep.subr.mxu0 0.0
      %1691 = vmatpush1.msra.mxu0 %v1688
      %1692 = vmatprep.subr.mxu0 0.0
      %1693 = vmatpush1.msra.mxu0 0.0
      %1694 = vmatprep.subr.mxu0 0.0
      %1695 = vmatpush1.msra.mxu0 0.0
      %1696 = vmatprep.subr.mxu0 0.0
      %1697 = vmatpush1.msra.mxu0 0.0
      %1698 = vmatprep.subr.mxu0 0.0
      %1699 = vmatpush1.msra.mxu0 0.0
      %1700 = vmatprep.subr.mxu0 0.0
      %1701 = vmatpush1.msra.mxu0 0.0
      %1702 = vmatprep.subr.mxu0 0.0
      %1703 = vmatpush1.msra.mxu0 0.0
      %1704 = vmatprep.subr.mxu0 0.0
      %1705 = vmatpush1.msra.mxu0 0.0
      %1706 = vmatprep.subr.mxu0 0.0
      %1707 = vmatpush1.msra.mxu0 0.0
      %1708 = vmatprep.subr.mxu0 0.0
      %1709 = vmatpush1.msra.mxu0 0.0
      %1710 = vmatprep.subr.mxu0 0.0
      %1711 = vmatpush1.msra.mxu0 0.0
      %1712 = vmatprep.subr.mxu0 0.0
      %1713 = vmatpush1.msra.mxu0 0.0
      %1714 = vmatprep.subr.mxu0 0.0
      %1715 = vmatpush1.msra.mxu0 0.0
      %1716 = vmatprep.subr.mxu0 0.0
      %1717 = vmatpush1.msra.mxu0 0.0
      %1718 = vmatprep.subr.mxu0 0.0
      %1719 = vmatpush1.msra.mxu0 0.0
      %1720 = vmatprep.subr.mxu0 0.0
      %1721 = vmatpush1.msra.mxu0 0.0
      %1722 = vmatprep.subr.mxu0 0.0
      %1723 = vmatpush1.msra.mxu0 0.0
      %1724 = vmatprep.subr.mxu0 0.0
      %1725 = vmatpush1.msra.mxu0 0.0
      %1726 = vmatprep.subr.mxu0 0.0
      %1727 = vmatpush1.msra.mxu0 0.0
      %1728 = vmatprep.subr.mxu0 0.0
      %1729 = vmatpush1.msra.mxu0 0.0
      %1730 = vmatprep.subr.mxu0 0.0
      %1731 = vmatpush1.msra.mxu0 0.0
      %1732 = vmatprep.subr.mxu0 0.0
      %1733 = vmatpush1.msra.mxu0 0.0
      %1734 = vmatprep.subr.mxu0 0.0
      %1735 = vmatpush1.msra.mxu0 0.0
      %1736 = vmatprep.subr.mxu0 0.0
      %1737 = vmatpush1.msra.mxu0 0.0
      %1738 = vmatprep.subr.mxu0 0.0
      %1739 = vmatpush1.msra.mxu0 0.0
      %1740 = vmatprep.subr.mxu0 0.0
      %1741 = vmatpush1.msra.mxu0 0.0
      %1742 = vmatprep.subr.mxu0 0.0
      %1743 = vmatpush1.msra.mxu0 0.0
      %1744 = vmatprep.subr.mxu0 0.0
      %1745 = vmatpush1.msra.mxu0 0.0
      %1746 = vmatprep.subr.mxu0 0.0
      %1747 = vmatpush1.msra.mxu0 0.0
      %1748 = vmatprep.subr.mxu0 0.0
      %1749 = vmatpush1.msra.mxu0 0.0
      %1750 = vmatprep.subr.mxu0 0.0
      %1751 = vmatpush1.msra.mxu0 0.0
      %1752 = vmatprep.subr.mxu0 0.0
      %1753 = vmatpush1.msra.mxu0 0.0
      %1754 = vmatprep.mubr.f32.mxu0 0.0
      %1755 = vmatmul.mubr.f32.gmra.mrb[0].mxu0 %v1664
      %v1756 = vpop.f32.mrb[0].mxu0
      %v1757 = vadd.f32 0.0, %v1756
      %v1758 = vpop.f32.mrb[0].mxu0
      %1759 = vmatprep.mubr.f32.mxu0 0.0
      %1760 = vmatmul.mubr.f32.gmra.mrb[0].mxu0 %v1667
      %v1761 = vpop.f32.mrb[0].mxu0
      %v1762 = vadd.f32 0.0, %v1761
      %v1763 = vpop.f32.mrb[0].mxu0
      %1764 = vmatprep.mubr.f32.mxu0 0.0
      %1765 = vmatmul.mubr.f32.gmra.mrb[0].mxu0 %v1670
      %v1766 = vpop.f32.mrb[0].mxu0
      %v1767 = vadd.f32 0.0, %v1766
      %v1768 = vpop.f32.mrb[0].mxu0
      %1769 = vmatprep.mubr.f32.mxu0 0.0
      %1770 = vmatmul.mubr.f32.gmra.mrb[0].mxu0 %v1673
      %v1771 = vpop.f32.mrb[0].mxu0
      %v1772 = vadd.f32 0.0, %v1771
      %v1773 = vpop.f32.mrb[0].mxu0
      %1774 = vmatprep.mubr.f32.mxu0 0.0
      %1775 = vmatmul.mubr.f32.gmra.mrb[0].mxu0 %v1676
      %v1776 = vpop.f32.mrb[0].mxu0
      %v1777 = vadd.f32 0.0, %v1776
      %v1778 = vpop.f32.mrb[0].mxu0
      %1779 = vmatprep.mubr.f32.mxu0 0.0
      %1780 = vmatmul.mubr.f32.gmra.mrb[0].mxu0 %v1679
      %v1781 = vpop.f32.mrb[0].mxu0
      %v1782 = vadd.f32 0.0, %v1781
      %v1783 = vpop.f32.mrb[0].mxu0
      %1784 = vmatprep.mubr.f32.mxu0 0.0
      %1785 = vmatmul.mubr.f32.gmra.mrb[0].mxu0 %v1682
      %v1786 = vpop.f32.mrb[0].mxu0
      %v1787 = vadd.f32 0.0, %v1786
      %v1788 = vpop.f32.mrb[0].mxu0
      %1789 = vmatprep.mubr.f32.mxu0 0.0
      %1790 = vmatmul.mubr.f32.gmra.mrb[0].mxu0 %v1685
      %v1791 = vpop.f32.mrb[0].mxu0
      %v1792 = vadd.f32 0.0, %v1791
      %v1793 = vpop.f32.mrb[0].mxu0
      %1794 = vdwg.mxu0
      %vm1795 = vcmask 588800
      %v1797 = vsel %vm1795, %v1636, 0
      %v1800 = vsel %vm1795, %v1637, 0
      %v1803 = vsel %vm1795, %v1638, 0
      %v1806 = vsel %vm1795, %v1639, 0
      %v1809 = vsel %vm1795, %v1640, 0
      %v1812 = vsel %vm1795, %v1641, 0
      %v1815 = vsel %vm1795, %v1642, 0
      %v1818 = vsel %vm1795, %v1643, 0
      %1820 = vmatprep.subr.mxu0 0.0
      %1821 = vmatpush1.msra.mxu0 %v1644
      %1822 = vmatprep.subr.mxu0 0.0
      %1823 = vmatpush1.msra.mxu0 %v1645
      %1824 = vmatprep.subr.mxu0 0.0
      %1825 = vmatpush1.msra.mxu0 %v1646
      %1826 = vmatprep.subr.mxu0 0.0
      %1827 = vmatpush1.msra.mxu0 %v1647
      %1828 = vmatprep.subr.mxu0 0.0
      %1829 = vmatpush1.msra.mxu0 %v1648
      %1830 = vmatprep.subr.mxu0 0.0
      %1831 = vmatpush1.msra.mxu0 %v1649
      %1832 = vmatprep.subr.mxu0 0.0
      %1833 = vmatpush1.msra.mxu0 %v1650
      %1834 = vmatprep.subr.mxu0 0.0
      %1835 = vmatpush1.msra.mxu0 %v1651
      %1836 = vmatprep.subr.mxu0 0.0
      %1837 = vmatpush1.msra.mxu0 %v1652
      %1838 = vmatprep.subr.mxu0 0.0
      %1839 = vmatpush1.msra.mxu0 0.0
      %1840 = vmatprep.subr.mxu0 0.0
      %1841 = vmatpush1.msra.mxu0 0.0
      %1842 = vmatprep.subr.mxu0 0.0
      %1843 = vmatpush1.msra.mxu0 0.0
      %1844 = vmatprep.subr.mxu0 0.0
      %1845 = vmatpush1.msra.mxu0 0.0
      %1846 = vmatprep.subr.mxu0 0.0
      %1847 = vmatpush1.msra.mxu0 0.0
      %1848 = vmatprep.subr.mxu0 0.0
      %1849 = vmatpush1.msra.mxu0 0.0
      %1850 = vmatprep.subr.mxu0 0.0
      %1851 = vmatpush1.msra.mxu0 0.0
      %1852 = vmatprep.subr.mxu0 0.0
      %1853 = vmatpush1.msra.mxu0 0.0
      %1854 = vmatprep.subr.mxu0 0.0
      %1855 = vmatpush1.msra.mxu0 0.0
      %1856 = vmatprep.subr.mxu0 0.0
      %1857 = vmatpush1.msra.mxu0 0.0
      %1858 = vmatprep.subr.mxu0 0.0
      %1859 = vmatpush1.msra.mxu0 0.0
      %1860 = vmatprep.subr.mxu0 0.0
      %1861 = vmatpush1.msra.mxu0 0.0
      %1862 = vmatprep.subr.mxu0 0.0
      %1863 = vmatpush1.msra.mxu0 0.0
      %1864 = vmatprep.subr.mxu0 0.0
      %1865 = vmatpush1.msra.mxu0 0.0
      %1866 = vmatprep.subr.mxu0 0.0
      %1867 = vmatpush1.msra.mxu0 0.0
      %1868 = vmatprep.subr.mxu0 0.0
      %1869 = vmatpush1.msra.mxu0 0.0
      %1870 = vmatprep.subr.mxu0 0.0
      %1871 = vmatpush1.msra.mxu0 0.0
      %1872 = vmatprep.subr.mxu0 0.0
      %1873 = vmatpush1.msra.mxu0 0.0
      %1874 = vmatprep.subr.mxu0 0.0
      %1875 = vmatpush1.msra.mxu0 0.0
      %1876 = vmatprep.subr.mxu0 0.0
      %1877 = vmatpush1.msra.mxu0 0.0
      %1878 = vmatprep.subr.mxu0 0.0
      %1879 = vmatpush1.msra.mxu0 0.0
      %1880 = vmatprep.subr.mxu0 0.0
      %1881 = vmatpush1.msra.mxu0 0.0
      %1882 = vmatprep.subr.mxu0 0.0
      %1883 = vmatpush1.msra.mxu0 0.0
      %1884 = vmatprep.mubr.f32.mxu0 0.0
      %1885 = vmatmul.mubr.f32.gmra.mrb[0].mxu0 %v1797
      %v1886 = vpop.f32.mrb[0].mxu0
      %v1887 = vadd.f32 %v1757, %v1886
      %v1888 = vpop.f32.mrb[0].mxu0
      %1889 = vmatprep.mubr.f32.mxu0 0.0
      %1890 = vmatmul.mubr.f32.gmra.mrb[0].mxu0 %v1800
      %v1891 = vpop.f32.mrb[0].mxu0
      %v1892 = vadd.f32 %v1762, %v1891
      %v1893 = vpop.f32.mrb[0].mxu0
      %1894 = vmatprep.mubr.f32.mxu0 0.0
      %1895 = vmatmul.mubr.f32.gmra.mrb[0].mxu0 %v1803
      %v1896 = vpop.f32.mrb[0].mxu0
      %v1897 = vadd.f32 %v1767, %v1896
      %v1898 = vpop.f32.mrb[0].mxu0
      %1899 = vmatprep.mubr.f32.mxu0 0.0
      %1900 = vmatmul.mubr.f32.gmra.mrb[0].mxu0 %v1806
      %v1901 = vpop.f32.mrb[0].mxu0
      %v1902 = vadd.f32 %v1772, %v1901
      %v1903 = vpop.f32.mrb[0].mxu0
      %1904 = vmatprep.mubr.f32.mxu0 0.0
      %1905 = vmatmul.mubr.f32.gmra.mrb[0].mxu0 %v1809
      %v1906 = vpop.f32.mrb[0].mxu0
      %v1907 = vadd.f32 %v1777, %v1906
      %v1908 = vpop.f32.mrb[0].mxu0
      %1909 = vmatprep.mubr.f32.mxu0 0.0
      %1910 = vmatmul.mubr.f32.gmra.mrb[0].mxu0 %v1812
      %v1911 = vpop.f32.mrb[0].mxu0
      %v1912 = vadd.f32 %v1782, %v1911
      %v1913 = vpop.f32.mrb[0].mxu0
      %1914 = vmatprep.mubr.f32.mxu0 0.0
      %1915 = vmatmul.mubr.f32.gmra.mrb[0].mxu0 %v1815
      %v1916 = vpop.f32.mrb[0].mxu0
      %v1917 = vadd.f32 %v1787, %v1916
      %v1918 = vpop.f32.mrb[0].mxu0
      %1919 = vmatprep.mubr.f32.mxu0 0.0
      %1920 = vmatmul.mubr.f32.gmra.mrb[0].mxu0 %v1818
      %v1921 = vpop.f32.mrb[0].mxu0
      %v1922 = vadd.f32 %v1792, %v1921
      %v1923 = vpop.f32.mrb[0].mxu0
      %1924 = vdwg.mxu0
      %v1925 = vld [vmem:[%s8] sm:$0x1]
      %v1927 = vlaneseq
      %v1928 = vshrl.u32 %v1927, 7
      %v1929 = vsub.s32 0, %v1928
      %v1930 = vrot.slane %v1925, %v1929
      %v1932 = vadd.f32 %v1887, %v1930
      %v1933 = vadd.f32 %v1892, %v1930
      %v1934 = vadd.f32 %v1897, %v1930
      %v1935 = vadd.f32 %v1902, %v1930
      %v1936 = vadd.f32 %v1907, %v1930
      %v1937 = vadd.f32 %v1912, %v1930
      %v1938 = vadd.f32 %v1917, %v1930
      %v1939 = vadd.f32 %v1922, %v1930
      %v1940 = vmax.f32 %v1932, 0.0
      %v1941 = vmax.f32 %v1933, 0.0
      %v1942 = vmax.f32 %v1934, 0.0
      %v1943 = vmax.f32 %v1935, 0.0
      %v1944 = vmax.f32 %v1936, 0.0
      %v1945 = vmax.f32 %v1937, 0.0
      %v1946 = vmax.f32 %v1938, 0.0
      %v1947 = vmax.f32 %v1939, 0.0
      %1948 = vst.msk [vmem:[%s470] sm:$0xff] %vm894, %v1940
      %1949 = vst.msk [vmem:[%s470 + $0x8] sm:$0xff] %vm894, %v1941
      %1950 = vst.msk [vmem:[%s470 + $0x10] sm:$0xff] %vm894, %v1942
      %1951 = vst.msk [vmem:[%s470 + $0x18] sm:$0xff] %vm894, %v1943
      %1952 = vst.msk [vmem:[%s470 + $0x20] sm:$0xff] %vm894, %v1944
      %1953 = vst.msk [vmem:[%s470 + $0x28] sm:$0xff] %vm894, %v1945
      %1954 = vst.msk [vmem:[%s470 + $0x30] sm:$0xff] %vm894, %v1946
      %1955 = vst.msk [vmem:[%s470 + $0x38] sm:$0xff] %vm894, %v1947
      %p1956 = scmp.lt.s32.totalorder %s24, 1
      %s1957 = scalar_select %p1956, %s24, 1
      %p1958 = scmp.lt.s32.totalorder %s25, 0
      %s1959 = scalar_select %p1958, %s25, 0
      %s1960 = smul.addr %s1959, 8
      %s1961 = smul.addr %s1957, 8
      %s1962 = sadd.s32 %s1960, %s1961
      %s1963 = smul.addr %s1962, 8
      %s1964 = scalar_lea.vmem %s9, %s1963
      // Predicated region
      $region57: #{block18_forward.1} parent=55 // pred_check
        %p1965 = pneg %p269
      $region58: #{block18_forward.1} parent=55 // pred_check_branch
        %1967 = sbr.rel (%p1965) target = $region60
      $region59: #{block18_forward.1} parent=55 // pred_region
        _
      $region60: #{block18_forward.1} parent=55 // pred_fallthru
        _
    $region56: #{block18_forward.1} parent=5 // pred_fallthru
      _
    %p1968 = scmp.le.s32.totalorder 2, %s15
    // Predicated region
    $region61: #{block18_forward.1} parent=5 // pred_check
      %p1969 = pneg %p1968
    $region62: #{block18_forward.1} parent=5 // pred_check_branch
      %1971 = sbr.rel (%p1969) target = $region64
    $region63: #{block18_forward.1} parent=5 // pred_region
      %s1972 = ssub.s32 %s15, 2
      // Predicated region
      $region65: #{block18_forward.1} parent=63 // pred_check
        %p1973 = pneg %p275
      $region66: #{block18_forward.1} parent=63 // pred_check_branch
        %1975 = sbr.rel (%p1973) target = $region68
      $region67: #{block18_forward.1} parent=63 // pred_region
        %p1976 = scmp.lt.s32.totalorder %s26, 1
        %s1977 = scalar_select %p1976, %s26, 1
        %p1978 = scmp.lt.s32.totalorder %s27, 0
        %s1979 = scalar_select %p1978, %s27, 0
        %s1980 = smul.addr %s1979, 8
        %s1981 = smul.addr %s1977, 8
        %s1982 = sadd.s32 %s1980, %s1981
        %s1983 = smul.addr %s1982, 8
        %s1984 = scalar_lea.vmem %s9, %s1983
      $region68: #{block18_forward.1} parent=63 // pred_fallthru
        _
    $region64: #{block18_forward.1} parent=5 // pred_fallthru
      _
  $region6: #{block18_forward.1} parent=0 // loop_footer
    %s19 = sadd.s32 1, %s15
  $region7: #{block18_forward.1} parent=0 // loop_footer_branch
    %14 = sbr.rel target = $region3
  $region8: #{block18_forward.1} parent=0 // loop_exit
    _

</llo_original>
